<compile_context>
chip_gen: v7x
topology: tpu7x:2x2x1
jax: 0.10.0
libtpu: 0.0.40
codegen_flags: <defaults>
</compile_context>

<pallas_src>
import functools
import itertools

import jax
import jax.numpy as jnp
from jax.experimental import pallas as pl
from jax.experimental.pallas import tpu as pltpu

EPS = 1e-5  # torch.nn.LayerNorm default


def _cdiv(a, b):
    return -(-a // b)


def _merge_norm_reduce_kernel(x_ref, wg_ref, bw_ref, o_ref, *, mxu_dtype, fuse_k):
    """Fused 2x2x2 merge + LayerNorm + bias-free Linear for one grid step.

    x_ref : (T0, 2, TH, 2, W2, 2C)  axes = (bd-tile, d-parity i, h-tile,
             h-parity j, w-half, (w-parity k, channel c))
    wg_ref: (8C, G) if fuse_k else (4, 2C, G)   gamma-folded reduction weight
    bw_ref: (1, G)   beta @ W  (f32)
    o_ref : (T0, TH, W2, G)
    """
    t0, _, th, _, w2, c2 = x_ref.shape
    g = o_ref.shape[-1]
    m = t0 * th * w2
    inv_feat = 1.0 / (4 * c2)          # == 1 / (8 * dim)

    def slc(i, j):                      # (T0, TH, W2, 2C) in f32
        return x_ref[:, i, :, j, :, :].astype(jnp.float32)

    # --- One-pass LayerNorm statistics: elementwise-accumulate the 4 slices, ---
    # --- then exactly 2 cross-lane (XLU) reductions.                          ---
    s = None
    ss = None
    for i in range(2):
        for j in range(2):
            v = slc(i, j)
            s = v if s is None else s + v
            ss = v * v if ss is None else ss + v * v
    mean = jnp.sum(s, axis=-1, keepdims=True) * inv_feat          # (T0,TH,W2,1)
    ex2 = jnp.sum(ss, axis=-1, keepdims=True) * inv_feat
    var = jnp.maximum(ex2 - mean * mean, 0.0)                     # guard cancellation
    rstd = jax.lax.rsqrt(var + EPS)

    def normalized(i, j):               # bf16 MXU operand, recomputed on demand
        return ((slc(i, j) - mean) * rstd).astype(mxu_dtype)

    # --- Bias-free reduction on the MXU (bf16 operands, f32 accumulation). ---
    if fuse_k:
        # Single K = 8*dim matmul: lane-concat the 4 groups (2*dim % 128 == 0,
        # so the concat is lane-aligned and the RHS streams into the MXU once).
        lhs = jnp.concatenate(
            [normalized(i, j) for i in range(2) for j in range(2)], axis=-1
        ).reshape(m, 4 * c2)
        acc = jnp.dot(lhs, wg_ref[...], preferred_element_type=jnp.float32)
    else:
        acc = None
        q = 0
        for i in range(2):
            for j in range(2):
                lhs = normalized(i, j).reshape(m, c2)
                part = jnp.dot(lhs, wg_ref[q], preferred_element_type=jnp.float32)
                acc = part if acc is None else acc + part
                q += 1

    bw = bw_ref[...].astype(jnp.float32)                          # (1, G)
    o_ref[...] = (acc + bw).reshape(t0, th, w2, g).astype(o_ref.dtype)


def patch_merging_v2(x, gamma, beta, w_red, *, token_target=1024,
                     vmem_budget_bytes=24 * 1024 * 1024,
                     mxu_dtype=jnp.bfloat16, out_dtype=None):
    """Forward pass of PatchMergingV2 (spatial_dims=3), channel-last input.

    x:      (B, D, H, W, C)
    gamma:  (8*C,)        LayerNorm weight
    beta:   (8*C,)        LayerNorm bias
    w_red:  (8*C, 2*C)    reduction weight (torch Linear weight, transposed)
    returns (B, ceil(D/2), ceil(H/2), ceil(W/2), 2*C) in `out_dtype` (default x.dtype)
    """
    b, d, h, w, c = x.shape
    if (d % 2) or (h % 2) or (w % 2):
        x = jnp.pad(x, ((0, 0), (0, d % 2), (0, h % 2), (0, w % 2), (0, 0)))
        b, d, h, w, c = x.shape
    d2, h2, w2 = d // 2, h // 2, w // 2
    c2 = 2 * c                         # (w-parity, channel) merged into the lane dim
    g = w_red.shape[1]                 # 2 * dim
    bd, hw2 = b * d2, h2 * w2
    out_dtype = x.dtype if out_dtype is None else out_dtype

    # Pure-metadata view (row-major): no activation copy is written to HBM.
    x6 = x.reshape(bd, 2, h2, 2, w2, c2)

    # Fold the LayerNorm affine into the reduction weight (one-time, weight-sized).
    # Feature order f = (i*4 + j*2 + k)*C + c == (i*2 + j)*(2C) + (k*C + c), so the
    # 8C rows reshaped to (4, 2C) group exactly by (i, j) == kernel slice order.
    gamma32 = gamma.astype(jnp.float32)
    beta32 = beta.astype(jnp.float32)
    w32 = w_red.astype(jnp.float32)
    fuse_k = (c2 % 128 == 0)           # lane-aligned groups -> single K = 8*dim dot
    wg_full = (gamma32[:, None] * w32).astype(mxu_dtype)          # (8C, G)
    wg = wg_full if fuse_k else wg_full.reshape(4, c2, g)
    bw = (beta32 @ w32).reshape(1, g)                             # stays f32

    # ---- Tile selection: ~token_target output tokens per step, VMEM-budgeted ----
    in_item = jnp.dtype(x.dtype).itemsize
    out_item = jnp.dtype(out_dtype).itemsize
    w_item = jnp.dtype(mxu_dtype).itemsize
    weight_bytes = 4 * c2 * g * w_item + g * 4                    # resident wg + bw
    per_token_bytes = 2 * (4 * c2 * in_item) + 2 * (g * out_item)  # dbl-buffered I/O
    tokens_cap = max(w2, (vmem_budget_bytes - weight_bytes) // per_token_bytes)
    tok_target = int(max(w2, min(token_target, tokens_cap)))

    if hw2 > tok_target:
        t0 = 1
        th = max(1, min(h2, tok_target // w2))
    else:
        th = h2
        t0 = max(1, min(bd, tok_target // max(1, hw2)))

    # Guarantee >= 4 grid steps (megacore + pipeline overlap) when possible.
    def _steps(t0_, th_):
        return _cdiv(bd, t0_) * _cdiv(h2, th_)
    while _steps(t0, th) < 4 and (t0 > 1 or th > 1):
        if t0 > 1:
            t0 = _cdiv(t0, 2)
        else:
            th = _cdiv(th, 2)
    # Balance tiles so the ragged last block isn't tiny (same step count).
    t0 = _cdiv(bd, _cdiv(bd, t0))
    th = _cdiv(h2, _cdiv(h2, th))
    grid = (_cdiv(bd, t0), _cdiv(h2, th))

    # Explicit scoped-VMEM limit computed from the real footprint.
    in_block_bytes = t0 * 2 * th * 2 * w2 * c2 * in_item
    out_block_bytes = t0 * th * w2 * g * out_item
    footprint = 2 * in_block_bytes + 2 * out_block_bytes + weight_bytes
    vmem_limit = int(min(64 * 1024 * 1024,
                         max(32 * 1024 * 1024, int(footprint * 1.5) + (4 << 20))))

    out = pl.pallas_call(
        functools.partial(_merge_norm_reduce_kernel,
                          mxu_dtype=mxu_dtype, fuse_k=fuse_k),
        out_shape=jax.ShapeDtypeStruct((bd, h2, w2, g), out_dtype),
        grid_spec=pltpu.PrefetchScalarGridSpec(
            num_scalar_prefetch=0,
            grid=grid,
            in_specs=[
                # Activations: blocked + double-buffered by the Pallas pipeline.
                pl.BlockSpec((t0, 2, th, 2, w2, c2),
                             lambda ib, ih: (ib, 0, ih, 0, 0, 0)),
                # Constants: whole-array resident in VMEM (no double buffering).
                pl.BlockSpec(memory_space=pltpu.MemorySpace.VMEM),
                pl.BlockSpec(memory_space=pltpu.MemorySpace.VMEM),
            ],
            out_specs=pl.BlockSpec((t0, th, w2, g),
                                   lambda ib, ih: (ib, ih, 0, 0)),
        ),
        compiler_params=pltpu.CompilerParams(
            dimension_semantics=("parallel", "parallel"),
            vmem_limit_bytes=vmem_limit,
        ),
    )(x6, wg, bw)

    return out.reshape(b, d2, h2, w2, g)


def _reference(x, gamma, beta, w_red):
    """Plain-JAX re-implementation of the torch forward (f32 throughout)."""
    b, d, h, w, c = x.shape
    if (d % 2) or (h % 2) or (w % 2):
        x = jnp.pad(x, ((0, 0), (0, d % 2), (0, h % 2), (0, w % 2), (0, 0)))
    parts = [
        x[:, i::2, j::2, k::2, :]
        for i, j, k in itertools.product(range(2), range(2), range(2))
    ]
    xm = jnp.concatenate(parts, axis=-1).astype(jnp.float32)
    mean = jnp.mean(xm, axis=-1, keepdims=True)
    var = jnp.mean((xm - mean) ** 2, axis=-1, keepdims=True)
    normed = (xm - mean) * jax.lax.rsqrt(var + EPS)
    normed = normed * gamma.astype(jnp.float32) + beta.astype(jnp.float32)
    return jnp.einsum("...f,fg->...g", normed, w_red.astype(jnp.float32))


if __name__ == "__main__":
    master_key = jax.random.PRNGKey(0)

    def run_case(case_idx, dim, b, d, h, w):
        key = jax.random.fold_in(master_key, case_idx)
        kx, kg, kb, kw = jax.random.split(key, 4)
        x = jax.random.normal(kx, (b, d, h, w, dim), dtype=jnp.float32)
        # Module params (torch shapes): LayerNorm(8*dim) gamma/beta and
        # Linear(8*dim, 2*dim, bias=False) weight stored transposed (8*dim, 2*dim).
        gamma = 1.0 + 0.1 * jax.random.normal(kg, (8 * dim,), dtype=jnp.float32)
        beta = 0.1 * jax.random.normal(kb, (8 * dim,), dtype=jnp.float32)
        w_red = 0.05 * jax.random.normal(kw, (8 * dim, 2 * dim), dtype=jnp.float32)

        out = jax.block_until_ready(patch_merging_v2(x, gamma, beta, w_red))
        ref = jax.block_until_ready(_reference(x, gamma, beta, w_red))
        assert out.shape == ref.shape, (out.shape, ref.shape)
        err = float(jnp.max(jnp.abs(out.astype(jnp.float32) - ref)))
        # bf16 MXU operands (f32 accumulation) vs. an all-f32 reference.
        assert err < 5e-2, f"case {case_idx} dim={dim} shape={(b, d, h, w)}: err={err}"

    # 1) 4-dot path (2*dim = 64 not lane-aligned), multi-step grid.
    run_case(0, dim=32, b=2, d=16, h=16, w=16)
    # 2) fused K = 8*dim path (2*dim = 128), small late-stage-like shape.
    run_case(1, dim=64, b=1, d=4, h=8, w=8)
    # 3) odd spatial shape (exercises padding) + ragged h-tiling + W/2 % 8 != 0.
    run_case(2, dim=16, b=1, d=5, h=9, w=7)

    print("KERNEL_OK")
</pallas_src>

<mosaic_0001>
module attributes {stable_mosaic.version = 11 : i64} {
  func.func @_merge_norm_reduce_kernel(%arg0: i32, %arg1: i32, %arg2: memref<4x2x8x2x8x64xf32, #tpu.memory_space<vmem>>, %arg3: memref<4x64x64xbf16, #tpu.memory_space<vmem>>, %arg4: memref<1x64xf32, #tpu.memory_space<vmem>>, %arg5: memref<4x8x8x64xf32, #tpu.memory_space<vmem>>) attributes {dimension_semantics = [#tpu.dimension_semantics<parallel>, #tpu.dimension_semantics<parallel>], iteration_bounds = array<i64: 4, 1>, scalar_prefetch = 0 : i64, scratch_operands = 0 : i64, tpu.core_type = #tpu.core_type<tc>, window_params = [{transform_indices = @transform_0, window_bounds = array<i64: 4, 2, 8, 2, 8, 64>}, {pipeline_mode = #tpu.pipeline_mode<synchronous>, transform_indices = @transform_1, window_bounds = array<i64: 4, 64, 64>}, {pipeline_mode = #tpu.pipeline_mode<synchronous>, transform_indices = @transform_2, window_bounds = array<i64: 1, 64>}, {transform_indices = @transform_3, window_bounds = array<i64: 4, 8, 8, 64>}]} {
    %c0 = arith.constant 0 : index
    %c0_0 = arith.constant 0 : index
    %c0_1 = arith.constant 0 : index
    %c0_2 = arith.constant 0 : index
    %c0_3 = arith.constant 0 : index
    %c0_4 = arith.constant 0 : index
    %0 = vector.load %arg2[%c0, %c0_0, %c0_1, %c0_2, %c0_3, %c0_4] : memref<4x2x8x2x8x64xf32, #tpu.memory_space<vmem>>, vector<4x1x8x1x8x64xf32>
    %1 = vector.shape_cast %0 : vector<4x1x8x1x8x64xf32> to vector<4x8x8x64xf32>
    %2 = arith.mulf %1, %1 : vector<4x8x8x64xf32>
    %c0_5 = arith.constant 0 : index
    %c0_6 = arith.constant 0 : index
    %c0_7 = arith.constant 0 : index
    %c1 = arith.constant 1 : index
    %c0_8 = arith.constant 0 : index
    %c0_9 = arith.constant 0 : index
    %3 = vector.load %arg2[%c0_5, %c0_6, %c0_7, %c1, %c0_8, %c0_9] : memref<4x2x8x2x8x64xf32, #tpu.memory_space<vmem>>, vector<4x1x8x1x8x64xf32>
    %4 = vector.shape_cast %3 : vector<4x1x8x1x8x64xf32> to vector<4x8x8x64xf32>
    %5 = arith.addf %1, %4 : vector<4x8x8x64xf32>
    %6 = arith.mulf %4, %4 : vector<4x8x8x64xf32>
    %7 = arith.addf %2, %6 : vector<4x8x8x64xf32>
    %c0_10 = arith.constant 0 : index
    %c1_11 = arith.constant 1 : index
    %c0_12 = arith.constant 0 : index
    %c0_13 = arith.constant 0 : index
    %c0_14 = arith.constant 0 : index
    %c0_15 = arith.constant 0 : index
    %8 = vector.load %arg2[%c0_10, %c1_11, %c0_12, %c0_13, %c0_14, %c0_15] : memref<4x2x8x2x8x64xf32, #tpu.memory_space<vmem>>, vector<4x1x8x1x8x64xf32>
    %9 = vector.shape_cast %8 : vector<4x1x8x1x8x64xf32> to vector<4x8x8x64xf32>
    %10 = arith.addf %5, %9 : vector<4x8x8x64xf32>
    %11 = arith.mulf %9, %9 : vector<4x8x8x64xf32>
    %12 = arith.addf %7, %11 : vector<4x8x8x64xf32>
    %c0_16 = arith.constant 0 : index
    %c1_17 = arith.constant 1 : index
    %c0_18 = arith.constant 0 : index
    %c1_19 = arith.constant 1 : index
    %c0_20 = arith.constant 0 : index
    %c0_21 = arith.constant 0 : index
    %13 = vector.load %arg2[%c0_16, %c1_17, %c0_18, %c1_19, %c0_20, %c0_21] : memref<4x2x8x2x8x64xf32, #tpu.memory_space<vmem>>, vector<4x1x8x1x8x64xf32>
    %14 = vector.shape_cast %13 : vector<4x1x8x1x8x64xf32> to vector<4x8x8x64xf32>
    %15 = arith.addf %10, %14 : vector<4x8x8x64xf32>
    %16 = arith.mulf %14, %14 : vector<4x8x8x64xf32>
    %17 = arith.addf %12, %16 : vector<4x8x8x64xf32>
    %cst = arith.constant dense<0.000000e+00> : vector<4x8x8xf32>
    %18 = vector.multi_reduction <add>, %15, %cst [3] : vector<4x8x8x64xf32> to vector<4x8x8xf32>
    %19 = vector.shape_cast %18 : vector<4x8x8xf32> to vector<4x8x8x1xf32>
    %cst_22 = arith.constant 3.906250e-03 : f32
    %20 = vector.broadcast %cst_22 : f32 to vector<4x8x8x1xf32>
    %21 = arith.mulf %19, %20 : vector<4x8x8x1xf32>
    %cst_23 = arith.constant dense<0.000000e+00> : vector<4x8x8xf32>
    %22 = vector.multi_reduction <add>, %17, %cst_23 [3] : vector<4x8x8x64xf32> to vector<4x8x8xf32>
    %23 = vector.shape_cast %22 : vector<4x8x8xf32> to vector<4x8x8x1xf32>
    %cst_24 = arith.constant 3.906250e-03 : f32
    %24 = vector.broadcast %cst_24 : f32 to vector<4x8x8x1xf32>
    %25 = arith.mulf %23, %24 : vector<4x8x8x1xf32>
    %26 = arith.mulf %21, %21 : vector<4x8x8x1xf32>
    %27 = arith.subf %25, %26 : vector<4x8x8x1xf32>
    %cst_25 = arith.constant 0.000000e+00 : f32
    %28 = vector.broadcast %cst_25 : f32 to vector<4x8x8x1xf32>
    %29 = arith.maximumf %27, %28 : vector<4x8x8x1xf32>
    %cst_26 = arith.constant 9.99999974E-6 : f32
    %30 = vector.broadcast %cst_26 : f32 to vector<4x8x8x1xf32>
    %31 = arith.addf %29, %30 : vector<4x8x8x1xf32>
    %32 = math.rsqrt %31 : vector<4x8x8x1xf32>
    %c0_27 = arith.constant 0 : index
    %c0_28 = arith.constant 0 : index
    %c0_29 = arith.constant 0 : index
    %c0_30 = arith.constant 0 : index
    %c0_31 = arith.constant 0 : index
    %c0_32 = arith.constant 0 : index
    %33 = vector.load %arg2[%c0_27, %c0_28, %c0_29, %c0_30, %c0_31, %c0_32] : memref<4x2x8x2x8x64xf32, #tpu.memory_space<vmem>>, vector<4x1x8x1x8x64xf32>
    %34 = vector.shape_cast %33 : vector<4x1x8x1x8x64xf32> to vector<4x8x8x64xf32>
    %35 = vector.broadcast %21 : vector<4x8x8x1xf32> to vector<4x8x8x64xf32>
    %36 = arith.subf %34, %35 : vector<4x8x8x64xf32>
    %37 = vector.broadcast %32 : vector<4x8x8x1xf32> to vector<4x8x8x64xf32>
    %38 = arith.mulf %36, %37 : vector<4x8x8x64xf32>
    %39 = arith.truncf %38 : vector<4x8x8x64xf32> to vector<4x8x8x64xbf16>
    %40 = vector.shape_cast %39 : vector<4x8x8x64xbf16> to vector<256x64xbf16>
    %c0_33 = arith.constant 0 : index
    %c0_34 = arith.constant 0 : index
    %c0_35 = arith.constant 0 : index
    %41 = vector.load %arg3[%c0_33, %c0_34, %c0_35] : memref<4x64x64xbf16, #tpu.memory_space<vmem>>, vector<1x64x64xbf16>
    %42 = vector.shape_cast %41 : vector<1x64x64xbf16> to vector<64x64xbf16>
    %cst_36 = arith.constant dense<0.000000e+00> : vector<256x64xf32>
    %43 = tpu.matmul %40, %42, %cst_36 {dimension_numbers = #tpu.dot_dimension_numbers<[1], [0], [0], [1], [0, 0, 1, 1], [], []>} : vector<256x64xbf16>, vector<64x64xbf16>, vector<256x64xf32> -> vector<256x64xf32>
    %c0_37 = arith.constant 0 : index
    %c0_38 = arith.constant 0 : index
    %c0_39 = arith.constant 0 : index
    %c1_40 = arith.constant 1 : index
    %c0_41 = arith.constant 0 : index
    %c0_42 = arith.constant 0 : index
    %44 = vector.load %arg2[%c0_37, %c0_38, %c0_39, %c1_40, %c0_41, %c0_42] : memref<4x2x8x2x8x64xf32, #tpu.memory_space<vmem>>, vector<4x1x8x1x8x64xf32>
    %45 = vector.shape_cast %44 : vector<4x1x8x1x8x64xf32> to vector<4x8x8x64xf32>
    %46 = vector.broadcast %21 : vector<4x8x8x1xf32> to vector<4x8x8x64xf32>
    %47 = arith.subf %45, %46 : vector<4x8x8x64xf32>
    %48 = vector.broadcast %32 : vector<4x8x8x1xf32> to vector<4x8x8x64xf32>
    %49 = arith.mulf %47, %48 : vector<4x8x8x64xf32>
    %50 = arith.truncf %49 : vector<4x8x8x64xf32> to vector<4x8x8x64xbf16>
    %51 = vector.shape_cast %50 : vector<4x8x8x64xbf16> to vector<256x64xbf16>
    %c1_43 = arith.constant 1 : index
    %c0_44 = arith.constant 0 : index
    %c0_45 = arith.constant 0 : index
    %52 = vector.load %arg3[%c1_43, %c0_44, %c0_45] : memref<4x64x64xbf16, #tpu.memory_space<vmem>>, vector<1x64x64xbf16>
    %53 = vector.shape_cast %52 : vector<1x64x64xbf16> to vector<64x64xbf16>
    %cst_46 = arith.constant dense<0.000000e+00> : vector<256x64xf32>
    %54 = tpu.matmul %51, %53, %cst_46 {dimension_numbers = #tpu.dot_dimension_numbers<[1], [0], [0], [1], [0, 0, 1, 1], [], []>} : vector<256x64xbf16>, vector<64x64xbf16>, vector<256x64xf32> -> vector<256x64xf32>
    %55 = arith.addf %43, %54 : vector<256x64xf32>
    %c0_47 = arith.constant 0 : index
    %c1_48 = arith.constant 1 : index
    %c0_49 = arith.constant 0 : index
    %c0_50 = arith.constant 0 : index
    %c0_51 = arith.constant 0 : index
    %c0_52 = arith.constant 0 : index
    %56 = vector.load %arg2[%c0_47, %c1_48, %c0_49, %c0_50, %c0_51, %c0_52] : memref<4x2x8x2x8x64xf32, #tpu.memory_space<vmem>>, vector<4x1x8x1x8x64xf32>
    %57 = vector.shape_cast %56 : vector<4x1x8x1x8x64xf32> to vector<4x8x8x64xf32>
    %58 = vector.broadcast %21 : vector<4x8x8x1xf32> to vector<4x8x8x64xf32>
    %59 = arith.subf %57, %58 : vector<4x8x8x64xf32>
    %60 = vector.broadcast %32 : vector<4x8x8x1xf32> to vector<4x8x8x64xf32>
    %61 = arith.mulf %59, %60 : vector<4x8x8x64xf32>
    %62 = arith.truncf %61 : vector<4x8x8x64xf32> to vector<4x8x8x64xbf16>
    %63 = vector.shape_cast %62 : vector<4x8x8x64xbf16> to vector<256x64xbf16>
    %c2 = arith.constant 2 : index
    %c0_53 = arith.constant 0 : index
    %c0_54 = arith.constant 0 : index
    %64 = vector.load %arg3[%c2, %c0_53, %c0_54] : memref<4x64x64xbf16, #tpu.memory_space<vmem>>, vector<1x64x64xbf16>
    %65 = vector.shape_cast %64 : vector<1x64x64xbf16> to vector<64x64xbf16>
    %cst_55 = arith.constant dense<0.000000e+00> : vector<256x64xf32>
    %66 = tpu.matmul %63, %65, %cst_55 {dimension_numbers = #tpu.dot_dimension_numbers<[1], [0], [0], [1], [0, 0, 1, 1], [], []>} : vector<256x64xbf16>, vector<64x64xbf16>, vector<256x64xf32> -> vector<256x64xf32>
    %67 = arith.addf %55, %66 : vector<256x64xf32>
    %c0_56 = arith.constant 0 : index
    %c1_57 = arith.constant 1 : index
    %c0_58 = arith.constant 0 : index
    %c1_59 = arith.constant 1 : index
    %c0_60 = arith.constant 0 : index
    %c0_61 = arith.constant 0 : index
    %68 = vector.load %arg2[%c0_56, %c1_57, %c0_58, %c1_59, %c0_60, %c0_61] : memref<4x2x8x2x8x64xf32, #tpu.memory_space<vmem>>, vector<4x1x8x1x8x64xf32>
    %69 = vector.shape_cast %68 : vector<4x1x8x1x8x64xf32> to vector<4x8x8x64xf32>
    %70 = vector.broadcast %21 : vector<4x8x8x1xf32> to vector<4x8x8x64xf32>
    %71 = arith.subf %69, %70 : vector<4x8x8x64xf32>
    %72 = vector.broadcast %32 : vector<4x8x8x1xf32> to vector<4x8x8x64xf32>
    %73 = arith.mulf %71, %72 : vector<4x8x8x64xf32>
    %74 = arith.truncf %73 : vector<4x8x8x64xf32> to vector<4x8x8x64xbf16>
    %75 = vector.shape_cast %74 : vector<4x8x8x64xbf16> to vector<256x64xbf16>
    %c3 = arith.constant 3 : index
    %c0_62 = arith.constant 0 : index
    %c0_63 = arith.constant 0 : index
    %76 = vector.load %arg3[%c3, %c0_62, %c0_63] : memref<4x64x64xbf16, #tpu.memory_space<vmem>>, vector<1x64x64xbf16>
    %77 = vector.shape_cast %76 : vector<1x64x64xbf16> to vector<64x64xbf16>
    %cst_64 = arith.constant dense<0.000000e+00> : vector<256x64xf32>
    %78 = tpu.matmul %75, %77, %cst_64 {dimension_numbers = #tpu.dot_dimension_numbers<[1], [0], [0], [1], [0, 0, 1, 1], [], []>} : vector<256x64xbf16>, vector<64x64xbf16>, vector<256x64xf32> -> vector<256x64xf32>
    %79 = arith.addf %67, %78 : vector<256x64xf32>
    %c0_65 = arith.constant 0 : index
    %c0_66 = arith.constant 0 : index
    %80 = vector.load %arg4[%c0_65, %c0_66] : memref<1x64xf32, #tpu.memory_space<vmem>>, vector<1x64xf32>
    %81 = vector.broadcast %80 : vector<1x64xf32> to vector<256x64xf32>
    %82 = arith.addf %79, %81 : vector<256x64xf32>
    %83 = vector.shape_cast %82 : vector<256x64xf32> to vector<4x8x8x64xf32>
    %c0_67 = arith.constant 0 : index
    %c0_68 = arith.constant 0 : index
    %c0_69 = arith.constant 0 : index
    %c0_70 = arith.constant 0 : index
    %84 = vector.load %arg5[%c0_67, %c0_68, %c0_69, %c0_70] : memref<4x8x8x64xf32, #tpu.memory_space<vmem>>, vector<4x8x8x64xf32>
    tpu.vector_store %arg5[%c0_67, %c0_68, %c0_69, %c0_70], %83 {strides = array<i32>} : memref<4x8x8x64xf32, #tpu.memory_space<vmem>>, vector<4x8x8x64xf32>,
    return
  }
  func.func @transform_0(%arg0: i32, %arg1: i32) -> (i32, i32, i32, i32, i32, i32) {
    %c0_i32 = arith.constant 0 : i32
    %c0_i32_0 = arith.constant 0 : i32
    %c0_i32_1 = arith.constant 0 : i32
    %c0_i32_2 = arith.constant 0 : i32
    %c0_i32_3 = arith.constant 0 : i32
    return %arg0, %c0_i32, %arg1, %c0_i32_0, %c0_i32_1, %c0_i32_2 : i32, i32, i32, i32, i32, i32
  }
  func.func @transform_1(%arg0: i32, %arg1: i32) -> (i32, i32, i32) {
    %c0_i32 = arith.constant 0 : i32
    %c0_i32_0 = arith.constant 0 : i32
    %c0_i32_1 = arith.constant 0 : i32
    %c0_i32_2 = arith.constant 0 : i32
    return %c0_i32, %c0_i32_0, %c0_i32_1 : i32, i32, i32
  }
  func.func @transform_2(%arg0: i32, %arg1: i32) -> (i32, i32) {
    %c0_i32 = arith.constant 0 : i32
    %c0_i32_0 = arith.constant 0 : i32
    %c0_i32_1 = arith.constant 0 : i32
    return %c0_i32, %c0_i32_0 : i32, i32
  }
  func.func @transform_3(%arg0: i32, %arg1: i32) -> (i32, i32, i32, i32) {
    %c0_i32 = arith.constant 0 : i32
    %c0_i32_0 = arith.constant 0 : i32
    %c0_i32_1 = arith.constant 0 : i32
    return %arg0, %arg1, %c0_i32, %c0_i32_0 : i32, i32, i32, i32
  }
}

</mosaic_0001>

<llo_original>
// kernel: tpu_custom_call.1
$region0: #{tpu_custom_call.1}
  #allocation0 [shape = 'u32[]', space=smem, size = 0x4, offset = 0x4, fixed_abs, tag = 'smem constant byte address 0x4 - core index']
  #allocation1 [shape = 'u32[144,128]{1,0:T(1,128)}', space=vmem, size = 0x12000, scoped, tag = 'internal scratch']
  %s0 = inlined_call_operand.hbm [shape: f32[16,2,8,2,8,64], index: 0, kind: input, shape index: {}]
  %s1 = inlined_call_operand.hbm [shape: bf16[4,64,64], index: 1, kind: input, shape index: {}]
  %s2 = inlined_call_operand.hbm [shape: f32[1,64], index: 2, kind: input, shape index: {}]
  %s3 = inlined_call_operand.hbm [shape: f32[16,8,8,64], index: 3, kind: output, shape index: {}]
  %s4 = sld [smem:[#allocation0]]
  $region57: #{tpu_custom_call.1} parent=0
    _
  %s6 = ssub.s32 1, %s4
  %s7 = scalar_select 0, %s6, %s4
  $region1: #{tpu_custom_call.1} parent=0
    #allocation2 [shape = 'u8[1048576]{0}', space=vmem, size = 0x100000, scoped, tag = 'input window, operand 0']
    #allocation3 [shape = 's32[2]{0}', space=sflag, size = 0x8, scoped, tag = 'scoped memory for tpu_custom_call.1']
    #allocation4 [shape = 's32[2]{0}', space=sflag, size = 0x8, scoped, tag = 'scoped memory for tpu_custom_call.1']
    #allocation5 [shape = 'u8[65536]{0}', space=vmem, size = 0x10000, scoped, tag = 'input window, operand 1, single buffered']
    #allocation6 [shape = 's32[1]{0}', space=sflag, size = 0x4, scoped, tag = 'scoped memory for tpu_custom_call.1']
    #allocation7 [shape = 'u8[512]{0}', space=vmem, size = 0x400, scoped, tag = 'input window, operand 2, single buffered']
    #allocation8 [shape = 'u8[262144]{0}', space=vmem, size = 0x40000, scoped, tag = 'output window, operand 0']
    %8 = vsyncpa [#allocation3], 0
    %s9 = scalar_lea.sflag [#allocation3], 1
    %10 = vsyncpa %s9, 0
    %11 = vsyncpa [#allocation6], 0
    %12 = vsyncpa [#allocation4], 0
    %s13 = scalar_lea.sflag [#allocation4], 1
    %14 = vsyncpa %s13, 0
    loop: start=0, step=1, limit=6
    $region2: #{tpu_custom_call.1} parent=1 // loop_pre_header
      _
    $region3: #{tpu_custom_call.1} parent=1 // loop_header
      %s16 = sphi 0, %s20
      %p17 = scmp.ge.s32.totalorder %s16, 6
      %s23 = sphi 0, %s35
      %s24 = sphi 0, %s31
      %s25 = sphi 0, %s23
      %s26 = sphi 0, %s24
      %s27 = sphi 0, %s25
      %s28 = sphi 0, %s26
      %s40 = sphi 0, %s42
      %s43 = sphi 0, %s40
      %s44 = sphi 0, %s43
      %s60 = sphi 0, %s44
      %s64 = sphi 0, %s64
      %s66 = sphi 0, %s64
      %s67 = sphi 0, %s66
      %s81 = sphi 0, %s67
      %s85 = sphi 0, %s85
      %s87 = sphi 0, %s85
      %s88 = sphi 0, %s87
      %s102 = sphi 0, %s88
      %s110 = sphi 0, %s112
      %s113 = sphi 0, %s110
      %s114 = sphi 0, %s113
      %s130 = sphi 0, %s114
    $region4: #{tpu_custom_call.1} parent=1 // loop_header_branch
      %19 = sbr.rel (%p17) target = $region8
    $region5: #{tpu_custom_call.1} parent=1 // loop_body
      %s21 = ssub.s32 %s16, 1
      %s22 = ssub.s32 %s16, 2
      %s29 = sadd.s32 1, %s24
      %p30 = scmp.ge.s32.totalorder %s29, 1
      %s31 = scalar_select %p30, 0, %s29
      %s32 = sadd.s32 1, %s23
      %s33 = scalar_select %p30, %s32, %s23
      %p34 = scmp.ge.s32.totalorder %s33, 4
      %s35 = scalar_select %p34, 0, %s33
      %s36 = ssub.s32 %s23, %s35
      %s37 = ssub.s32 %s24, %s31
      %s38 = sor.u32 %s36, %s37
      %p39 = scmp.eq.s32.totalorder %s38, 0
      %s41 = sadd.s32 %s40, 1
      %s42 = scalar_select %p39, %s40, %s41
      %p45 = pneg %p39
      %p46 = scmp.eq.s32.totalorder %s16, 3
      %p47 = por %p45, %p46
      %p48 = scmp.ne.s32.totalorder %s40, %s43
      %p49 = scmp.eq.s32.totalorder %s16, 0
      %p50 = por %p48, %p49
      %p51 = scmp.ne.s32.totalorder %s40, %s43
      %p52 = scmp.eq.s32.totalorder %s21, 3
      %p53 = por %p51, %p52
      %p54 = scmp.ne.s32.totalorder %s43, %s44
      %p55 = scmp.eq.s32.totalorder %s21, 0
      %p56 = por %p54, %p55
      %p57 = scmp.ne.s32.totalorder %s43, %s44
      %p58 = scmp.eq.s32.totalorder %s22, 3
      %p59 = por %p57, %p58
      %p61 = scmp.ne.s32.totalorder %s44, %s60
      %p62 = scmp.eq.s32.totalorder %s22, 0
      %p63 = por %p61, %p62
      %s65 = sadd.s32 %s64, 1
      %p68 = scmp.eq.s32.totalorder %s16, 3
      %p69 = scmp.ne.s32.totalorder %s64, %s66
      %p70 = scmp.eq.s32.totalorder %s16, 0
      %p71 = por %p69, %p70
      %p72 = scmp.ne.s32.totalorder %s64, %s66
      %p73 = scmp.eq.s32.totalorder %s21, 3
      %p74 = por %p72, %p73
      %p75 = scmp.ne.s32.totalorder %s66, %s67
      %p76 = scmp.eq.s32.totalorder %s21, 0
      %p77 = por %p75, %p76
      %p78 = scmp.ne.s32.totalorder %s66, %s67
      %p79 = scmp.eq.s32.totalorder %s22, 3
      %p80 = por %p78, %p79
      %p82 = scmp.ne.s32.totalorder %s67, %s81
      %p83 = scmp.eq.s32.totalorder %s22, 0
      %p84 = por %p82, %p83
      %s86 = sadd.s32 %s85, 1
      %p89 = scmp.eq.s32.totalorder %s16, 3
      %p90 = scmp.ne.s32.totalorder %s85, %s87
      %p91 = scmp.eq.s32.totalorder %s16, 0
      %p92 = por %p90, %p91
      %p93 = scmp.ne.s32.totalorder %s85, %s87
      %p94 = scmp.eq.s32.totalorder %s21, 3
      %p95 = por %p93, %p94
      %p96 = scmp.ne.s32.totalorder %s87, %s88
      %p97 = scmp.eq.s32.totalorder %s21, 0
      %p98 = por %p96, %p97
      %p99 = scmp.ne.s32.totalorder %s87, %s88
      %p100 = scmp.eq.s32.totalorder %s22, 3
      %p101 = por %p99, %p100
      %p103 = scmp.ne.s32.totalorder %s88, %s102
      %p104 = scmp.eq.s32.totalorder %s22, 0
      %p105 = por %p103, %p104
      %s106 = ssub.s32 %s23, %s35
      %s107 = ssub.s32 %s24, %s31
      %s108 = sor.u32 %s106, %s107
      %p109 = scmp.eq.s32.totalorder %s108, 0
      %s111 = sadd.s32 %s110, 1
      %s112 = scalar_select %p109, %s110, %s111
      %p115 = pneg %p109
      %p116 = scmp.eq.s32.totalorder %s16, 3
      %p117 = por %p115, %p116
      %p118 = scmp.ne.s32.totalorder %s110, %s113
      %p119 = scmp.eq.s32.totalorder %s16, 0
      %p120 = por %p118, %p119
      %p121 = scmp.ne.s32.totalorder %s110, %s113
      %p122 = scmp.eq.s32.totalorder %s21, 3
      %p123 = por %p121, %p122
      %p124 = scmp.ne.s32.totalorder %s113, %s114
      %p125 = scmp.eq.s32.totalorder %s21, 0
      %p126 = por %p124, %p125
      %p127 = scmp.ne.s32.totalorder %s113, %s114
      %p128 = scmp.eq.s32.totalorder %s22, 3
      %p129 = por %p127, %p128
      %p131 = scmp.ne.s32.totalorder %s114, %s130
      %p132 = scmp.eq.s32.totalorder %s22, 0
      %p133 = por %p131, %p132
      %p134 = scmp.le.s32.totalorder 1, %s16
      %p135 = scmp.lt.s32.totalorder %s16, 5
      %p136 = pnand %p134, %p135
      %p137 = pneg %p136
      // Predicated region
      $region9: #{tpu_custom_call.1} parent=5 // pred_check
        _
      $region10: #{tpu_custom_call.1} parent=5 // pred_check_branch
        %139 = sbr.rel (%p136) target = $region12
      $region11: #{tpu_custom_call.1} parent=5 // pred_region
        %s140 = ssub.s32 %s16, 1
        // Predicated region
        $region13: #{tpu_custom_call.1} parent=11 // pred_check
          %p141 = pneg %p77
        $region14: #{tpu_custom_call.1} parent=11 // pred_check_branch
          %143 = sbr.rel (%p141) target = $region16
        $region15: #{tpu_custom_call.1} parent=11 // pred_region
          %s145 = ssub.s32 2048, 2048
          %146 = vsyncadd [#allocation6], %s145
          %s147 = sshll.u32 [#allocation5], 4
          %s148 = int_to_ptr.vmem [resolvable:$true] %s147
          %153 = dma.hbm_to_vmem [thread:$0]  %s1, 2048, %s148, [#allocation6], 64, 64, 4
        $region16: #{tpu_custom_call.1} parent=11 // pred_fallthru
          _
        // Predicated region
        $region17: #{tpu_custom_call.1} parent=11 // pred_check
          %p154 = pneg %p98
        $region18: #{tpu_custom_call.1} parent=11 // pred_check_branch
          %156 = sbr.rel (%p154) target = $region20
        $region19: #{tpu_custom_call.1} parent=11 // pred_region
          %s158 = ssub.s32 16, 16
          %159 = vsyncadd [#allocation6], %s158
          %s161 = sshll.u32 [#allocation7], 4
          %s162 = int_to_ptr.vmem [resolvable:$true] %s161
          %164 = dma.hbm_to_vmem [thread:$0]  %s2, 16, %s162, [#allocation6]
        $region20: #{tpu_custom_call.1} parent=11 // pred_fallthru
          _
      $region12: #{tpu_custom_call.1} parent=5 // pred_fallthru
        _
      %p165 = scmp.lt.s32.totalorder %s16, 4
      // Predicated region
      $region21: #{tpu_custom_call.1} parent=5 // pred_check
        %p166 = pneg %p165
      $region22: #{tpu_custom_call.1} parent=5 // pred_check_branch
        %168 = sbr.rel (%p166) target = $region24
      $region23: #{tpu_custom_call.1} parent=5 // pred_region
        // Predicated region
        $region25: #{tpu_custom_call.1} parent=23 // pred_check
          %p169 = pneg %p50
        $region26: #{tpu_custom_call.1} parent=23 // pred_check_branch
          %171 = sbr.rel (%p169) target = $region28
        $region27: #{tpu_custom_call.1} parent=23 // pred_region
          %s172 = sand.u32 %s40, 1
          %s173 = scalar_lea.sflag [#allocation3], %s172
          %s174 = sand.u32 %s40, 1
          %s175 = smul.addr %s174, 1024
          %s176 = scalar_lea.vmem [#allocation2], %s175
          %s177 = smul.u32 4, %s23
          %s178 = smul.u32 8, %s24
          %s180 = ssub.s32 16384, 16384
          %181 = vsyncadd %s173, %s180
          %s182 = smul.addr %s178, 2
          %s183 = smul.addr %s177, 32
          %s184 = sadd.s32 %s182, %s183
          %s185 = smul.addr %s184, 128
          %s186 = scalar_lea.hbm %s0, %s185
          %s187 = sshll.u32 %s176, 4
          %s188 = int_to_ptr.vmem [resolvable:$true] %s187
          %193 = dma.hbm_to_vmem [thread:$0]  %s186, 16384, %s188, %s173, 128, 128, 8
        $region28: #{tpu_custom_call.1} parent=23 // pred_fallthru
          _
      $region24: #{tpu_custom_call.1} parent=5 // pred_fallthru
        _
      %p194 = scmp.le.s32.totalorder 1, %s16
      %p195 = scmp.lt.s32.totalorder %s16, 5
      %p196 = pnand %p194, %p195
      %p197 = pneg %p196
      // Predicated region
      $region29: #{tpu_custom_call.1} parent=5 // pred_check
        _
      $region30: #{tpu_custom_call.1} parent=5 // pred_check_branch
        %199 = sbr.rel (%p196) target = $region32
      $region31: #{tpu_custom_call.1} parent=5 // pred_region
        %s200 = ssub.s32 %s16, 1
        %s201 = sand.u32 %s43, 1
        %s202 = scalar_lea.sflag [#allocation3], %s201
        %s203 = sand.u32 %s43, 1
        %s204 = smul.addr %s203, 1024
        %s205 = scalar_lea.vmem [#allocation2], %s204
        // Predicated region
        $region33: #{tpu_custom_call.1} parent=31 // pred_check
          %p206 = pneg %p56
        $region34: #{tpu_custom_call.1} parent=31 // pred_check_branch
          %208 = sbr.rel (%p206) target = $region36
        $region35: #{tpu_custom_call.1} parent=31 // pred_region
          %209 = dma.done %s202, 16384
        $region36: #{tpu_custom_call.1} parent=31 // pred_fallthru
          _
        // Predicated region
        $region37: #{tpu_custom_call.1} parent=31 // pred_check
          %p210 = pneg %p77
        $region38: #{tpu_custom_call.1} parent=31 // pred_check_branch
          %212 = sbr.rel (%p210) target = $region40
        $region39: #{tpu_custom_call.1} parent=31 // pred_region
          %213 = dma.done [#allocation6], 2048
        $region40: #{tpu_custom_call.1} parent=31 // pred_fallthru
          _
        // Predicated region
        $region41: #{tpu_custom_call.1} parent=31 // pred_check
          %p214 = pneg %p98
        $region42: #{tpu_custom_call.1} parent=31 // pred_check_branch
          %216 = sbr.rel (%p214) target = $region44
        $region43: #{tpu_custom_call.1} parent=31 // pred_region
          %217 = dma.done [#allocation6], 16
        $region44: #{tpu_custom_call.1} parent=31 // pred_fallthru
          _
        %s218 = sand.u32 %s43, 1
        %s219 = scalar_lea.sflag [#allocation3], %s218
        %s220 = sand.u32 %s43, 1
        %s221 = smul.addr %s220, 1024
        %s222 = scalar_lea.vmem [#allocation2], %s221
        %p223 = pneg %p56
        %p224 = pneg %p53
        %p225 = pneg %p77
        %p226 = pneg %p74
        %p227 = pneg %p98
        %p228 = pneg %p95
        %p229 = pneg %p126
        %p230 = pneg %p123
        %s231 = sand.u32 %s113, 1
        %s232 = scalar_lea.sflag [#allocation4], %s231
        %s233 = sand.u32 %s113, 1
        %s234 = smul.addr %s233, 256
        %s235 = scalar_lea.vmem [#allocation8], %s234
        %s236 = smul.u32 4, %s25
        %s237 = smul.u32 8, %s26
        %s238 = smul.u32 4, %s25
        %s239 = smul.u32 8, %s26
        %v241 = vld [vmem:[%s205] sm:$0xff]
        %v242 = vld [vmem:[%s205 + $0x10] sm:$0xff]
        %v243 = vld [vmem:[%s205 + $0x20] sm:$0xff]
        %v244 = vld [vmem:[%s205 + $0x30] sm:$0xff]
        %v245 = vld [vmem:[%s205 + $0x40] sm:$0xff]
        %v246 = vld [vmem:[%s205 + $0x50] sm:$0xff]
        %v247 = vld [vmem:[%s205 + $0x60] sm:$0xff]
        %v248 = vld [vmem:[%s205 + $0x70] sm:$0xff]
        %v249 = vld [vmem:[%s205 + $0x100] sm:$0xff]
        %v250 = vld [vmem:[%s205 + $0x110] sm:$0xff]
        %v251 = vld [vmem:[%s205 + $0x120] sm:$0xff]
        %v252 = vld [vmem:[%s205 + $0x130] sm:$0xff]
        %v253 = vld [vmem:[%s205 + $0x140] sm:$0xff]
        %v254 = vld [vmem:[%s205 + $0x150] sm:$0xff]
        %v255 = vld [vmem:[%s205 + $0x160] sm:$0xff]
        %v256 = vld [vmem:[%s205 + $0x170] sm:$0xff]
        %v257 = vld [vmem:[%s205 + $0x200] sm:$0xff]
        %v258 = vld [vmem:[%s205 + $0x210] sm:$0xff]
        %v259 = vld [vmem:[%s205 + $0x220] sm:$0xff]
        %v260 = vld [vmem:[%s205 + $0x230] sm:$0xff]
        %v261 = vld [vmem:[%s205 + $0x240] sm:$0xff]
        %v262 = vld [vmem:[%s205 + $0x250] sm:$0xff]
        %v263 = vld [vmem:[%s205 + $0x260] sm:$0xff]
        %v264 = vld [vmem:[%s205 + $0x270] sm:$0xff]
        %v265 = vld [vmem:[%s205 + $0x300] sm:$0xff]
        %v266 = vld [vmem:[%s205 + $0x310] sm:$0xff]
        %v267 = vld [vmem:[%s205 + $0x320] sm:$0xff]
        %v268 = vld [vmem:[%s205 + $0x330] sm:$0xff]
        %v269 = vld [vmem:[%s205 + $0x340] sm:$0xff]
        %v270 = vld [vmem:[%s205 + $0x350] sm:$0xff]
        %v271 = vld [vmem:[%s205 + $0x360] sm:$0xff]
        %v272 = vld [vmem:[%s205 + $0x370] sm:$0xff]
        %v273 = vmul.f32 %v241, %v241
        %v274 = vmul.f32 %v242, %v242
        %v275 = vmul.f32 %v243, %v243
        %v276 = vmul.f32 %v244, %v244
        %v277 = vmul.f32 %v245, %v245
        %v278 = vmul.f32 %v246, %v246
        %v279 = vmul.f32 %v247, %v247
        %v280 = vmul.f32 %v248, %v248
        %v281 = vmul.f32 %v249, %v249
        %v282 = vmul.f32 %v250, %v250
        %v283 = vmul.f32 %v251, %v251
        %v284 = vmul.f32 %v252, %v252
        %v285 = vmul.f32 %v253, %v253
        %v286 = vmul.f32 %v254, %v254
        %v287 = vmul.f32 %v255, %v255
        %v288 = vmul.f32 %v256, %v256
        %v289 = vmul.f32 %v257, %v257
        %v290 = vmul.f32 %v258, %v258
        %v291 = vmul.f32 %v259, %v259
        %v292 = vmul.f32 %v260, %v260
        %v293 = vmul.f32 %v261, %v261
        %v294 = vmul.f32 %v262, %v262
        %v295 = vmul.f32 %v263, %v263
        %v296 = vmul.f32 %v264, %v264
        %v297 = vmul.f32 %v265, %v265
        %v298 = vmul.f32 %v266, %v266
        %v299 = vmul.f32 %v267, %v267
        %v300 = vmul.f32 %v268, %v268
        %v301 = vmul.f32 %v269, %v269
        %v302 = vmul.f32 %v270, %v270
        %v303 = vmul.f32 %v271, %v271
        %v304 = vmul.f32 %v272, %v272
        %s305 = scalar_lea.vmem %s205, 8 [#allocation2]
        %v306 = vld [vmem:[%s305] sm:$0xff]
        %v307 = vld [vmem:[%s305 + $0x10] sm:$0xff]
        %v308 = vld [vmem:[%s305 + $0x20] sm:$0xff]
        %v309 = vld [vmem:[%s305 + $0x30] sm:$0xff]
        %v310 = vld [vmem:[%s305 + $0x40] sm:$0xff]
        %v311 = vld [vmem:[%s305 + $0x50] sm:$0xff]
        %v312 = vld [vmem:[%s305 + $0x60] sm:$0xff]
        %v313 = vld [vmem:[%s305 + $0x70] sm:$0xff]
        %v314 = vld [vmem:[%s305 + $0x100] sm:$0xff]
        %v315 = vld [vmem:[%s305 + $0x110] sm:$0xff]
        %v316 = vld [vmem:[%s305 + $0x120] sm:$0xff]
        %v317 = vld [vmem:[%s305 + $0x130] sm:$0xff]
        %v318 = vld [vmem:[%s305 + $0x140] sm:$0xff]
        %v319 = vld [vmem:[%s305 + $0x150] sm:$0xff]
        %v320 = vld [vmem:[%s305 + $0x160] sm:$0xff]
        %v321 = vld [vmem:[%s305 + $0x170] sm:$0xff]
        %v322 = vld [vmem:[%s305 + $0x200] sm:$0xff]
        %v323 = vld [vmem:[%s305 + $0x210] sm:$0xff]
        %v324 = vld [vmem:[%s305 + $0x220] sm:$0xff]
        %v325 = vld [vmem:[%s305 + $0x230] sm:$0xff]
        %v326 = vld [vmem:[%s305 + $0x240] sm:$0xff]
        %v327 = vld [vmem:[%s305 + $0x250] sm:$0xff]
        %v328 = vld [vmem:[%s305 + $0x260] sm:$0xff]
        %v329 = vld [vmem:[%s305 + $0x270] sm:$0xff]
        %v330 = vld [vmem:[%s305 + $0x300] sm:$0xff]
        %v331 = vld [vmem:[%s305 + $0x310] sm:$0xff]
        %v332 = vld [vmem:[%s305 + $0x320] sm:$0xff]
        %v333 = vld [vmem:[%s305 + $0x330] sm:$0xff]
        %v334 = vld [vmem:[%s305 + $0x340] sm:$0xff]
        %v335 = vld [vmem:[%s305 + $0x350] sm:$0xff]
        %v336 = vld [vmem:[%s305 + $0x360] sm:$0xff]
        %v337 = vld [vmem:[%s305 + $0x370] sm:$0xff]
        %v338 = vadd.f32 %v241, %v306
        %v339 = vadd.f32 %v242, %v307
        %v340 = vadd.f32 %v243, %v308
        %v341 = vadd.f32 %v244, %v309
        %v342 = vadd.f32 %v245, %v310
        %v343 = vadd.f32 %v246, %v311
        %v344 = vadd.f32 %v247, %v312
        %v345 = vadd.f32 %v248, %v313
        %v346 = vadd.f32 %v249, %v314
        %v347 = vadd.f32 %v250, %v315
        %v348 = vadd.f32 %v251, %v316
        %v349 = vadd.f32 %v252, %v317
        %v350 = vadd.f32 %v253, %v318
        %v351 = vadd.f32 %v254, %v319
        %v352 = vadd.f32 %v255, %v320
        %v353 = vadd.f32 %v256, %v321
        %v354 = vadd.f32 %v257, %v322
        %v355 = vadd.f32 %v258, %v323
        %v356 = vadd.f32 %v259, %v324
        %v357 = vadd.f32 %v260, %v325
        %v358 = vadd.f32 %v261, %v326
        %v359 = vadd.f32 %v262, %v327
        %v360 = vadd.f32 %v263, %v328
        %v361 = vadd.f32 %v264, %v329
        %v362 = vadd.f32 %v265, %v330
        %v363 = vadd.f32 %v266, %v331
        %v364 = vadd.f32 %v267, %v332
        %v365 = vadd.f32 %v268, %v333
        %v366 = vadd.f32 %v269, %v334
        %v367 = vadd.f32 %v270, %v335
        %v368 = vadd.f32 %v271, %v336
        %v369 = vadd.f32 %v272, %v337
        %v370 = vmul.f32 %v306, %v306
        %v371 = vmul.f32 %v307, %v307
        %v372 = vmul.f32 %v308, %v308
        %v373 = vmul.f32 %v309, %v309
        %v374 = vmul.f32 %v310, %v310
        %v375 = vmul.f32 %v311, %v311
        %v376 = vmul.f32 %v312, %v312
        %v377 = vmul.f32 %v313, %v313
        %v378 = vmul.f32 %v314, %v314
        %v379 = vmul.f32 %v315, %v315
        %v380 = vmul.f32 %v316, %v316
        %v381 = vmul.f32 %v317, %v317
        %v382 = vmul.f32 %v318, %v318
        %v383 = vmul.f32 %v319, %v319
        %v384 = vmul.f32 %v320, %v320
        %v385 = vmul.f32 %v321, %v321
        %v386 = vmul.f32 %v322, %v322
        %v387 = vmul.f32 %v323, %v323
        %v388 = vmul.f32 %v324, %v324
        %v389 = vmul.f32 %v325, %v325
        %v390 = vmul.f32 %v326, %v326
        %v391 = vmul.f32 %v327, %v327
        %v392 = vmul.f32 %v328, %v328
        %v393 = vmul.f32 %v329, %v329
        %v394 = vmul.f32 %v330, %v330
        %v395 = vmul.f32 %v331, %v331
        %v396 = vmul.f32 %v332, %v332
        %v397 = vmul.f32 %v333, %v333
        %v398 = vmul.f32 %v334, %v334
        %v399 = vmul.f32 %v335, %v335
        %v400 = vmul.f32 %v336, %v336
        %v401 = vmul.f32 %v337, %v337
        %v402 = vadd.f32 %v273, %v370
        %v403 = vadd.f32 %v274, %v371
        %v404 = vadd.f32 %v275, %v372
        %v405 = vadd.f32 %v276, %v373
        %v406 = vadd.f32 %v277, %v374
        %v407 = vadd.f32 %v278, %v375
        %v408 = vadd.f32 %v279, %v376
        %v409 = vadd.f32 %v280, %v377
        %v410 = vadd.f32 %v281, %v378
        %v411 = vadd.f32 %v282, %v379
        %v412 = vadd.f32 %v283, %v380
        %v413 = vadd.f32 %v284, %v381
        %v414 = vadd.f32 %v285, %v382
        %v415 = vadd.f32 %v286, %v383
        %v416 = vadd.f32 %v287, %v384
        %v417 = vadd.f32 %v288, %v385
        %v418 = vadd.f32 %v289, %v386
        %v419 = vadd.f32 %v290, %v387
        %v420 = vadd.f32 %v291, %v388
        %v421 = vadd.f32 %v292, %v389
        %v422 = vadd.f32 %v293, %v390
        %v423 = vadd.f32 %v294, %v391
        %v424 = vadd.f32 %v295, %v392
        %v425 = vadd.f32 %v296, %v393
        %v426 = vadd.f32 %v297, %v394
        %v427 = vadd.f32 %v298, %v395
        %v428 = vadd.f32 %v299, %v396
        %v429 = vadd.f32 %v300, %v397
        %v430 = vadd.f32 %v301, %v398
        %v431 = vadd.f32 %v302, %v399
        %v432 = vadd.f32 %v303, %v400
        %v433 = vadd.f32 %v304, %v401
        %s434 = scalar_lea.vmem %s205, 128 [#allocation2]
        %v435 = vld [vmem:[%s434] sm:$0xff]
        %v436 = vld [vmem:[%s434 + $0x10] sm:$0xff]
        %v437 = vld [vmem:[%s434 + $0x20] sm:$0xff]
        %v438 = vld [vmem:[%s434 + $0x30] sm:$0xff]
        %v439 = vld [vmem:[%s434 + $0x40] sm:$0xff]
        %v440 = vld [vmem:[%s434 + $0x50] sm:$0xff]
        %v441 = vld [vmem:[%s434 + $0x60] sm:$0xff]
        %v442 = vld [vmem:[%s434 + $0x70] sm:$0xff]
        %v443 = vld [vmem:[%s434 + $0x100] sm:$0xff]
        %v444 = vld [vmem:[%s434 + $0x110] sm:$0xff]
        %v445 = vld [vmem:[%s434 + $0x120] sm:$0xff]
        %v446 = vld [vmem:[%s434 + $0x130] sm:$0xff]
        %v447 = vld [vmem:[%s434 + $0x140] sm:$0xff]
        %v448 = vld [vmem:[%s434 + $0x150] sm:$0xff]
        %v449 = vld [vmem:[%s434 + $0x160] sm:$0xff]
        %v450 = vld [vmem:[%s434 + $0x170] sm:$0xff]
        %v451 = vld [vmem:[%s434 + $0x200] sm:$0xff]
        %v452 = vld [vmem:[%s434 + $0x210] sm:$0xff]
        %v453 = vld [vmem:[%s434 + $0x220] sm:$0xff]
        %v454 = vld [vmem:[%s434 + $0x230] sm:$0xff]
        %v455 = vld [vmem:[%s434 + $0x240] sm:$0xff]
        %v456 = vld [vmem:[%s434 + $0x250] sm:$0xff]
        %v457 = vld [vmem:[%s434 + $0x260] sm:$0xff]
        %v458 = vld [vmem:[%s434 + $0x270] sm:$0xff]
        %v459 = vld [vmem:[%s434 + $0x300] sm:$0xff]
        %v460 = vld [vmem:[%s434 + $0x310] sm:$0xff]
        %v461 = vld [vmem:[%s434 + $0x320] sm:$0xff]
        %v462 = vld [vmem:[%s434 + $0x330] sm:$0xff]
        %v463 = vld [vmem:[%s434 + $0x340] sm:$0xff]
        %v464 = vld [vmem:[%s434 + $0x350] sm:$0xff]
        %v465 = vld [vmem:[%s434 + $0x360] sm:$0xff]
        %v466 = vld [vmem:[%s434 + $0x370] sm:$0xff]
        %v467 = vadd.f32 %v338, %v435
        %v468 = vadd.f32 %v339, %v436
        %v469 = vadd.f32 %v340, %v437
        %v470 = vadd.f32 %v341, %v438
        %v471 = vadd.f32 %v342, %v439
        %v472 = vadd.f32 %v343, %v440
        %v473 = vadd.f32 %v344, %v441
        %v474 = vadd.f32 %v345, %v442
        %v475 = vadd.f32 %v346, %v443
        %v476 = vadd.f32 %v347, %v444
        %v477 = vadd.f32 %v348, %v445
        %v478 = vadd.f32 %v349, %v446
        %v479 = vadd.f32 %v350, %v447
        %v480 = vadd.f32 %v351, %v448
        %v481 = vadd.f32 %v352, %v449
        %v482 = vadd.f32 %v353, %v450
        %v483 = vadd.f32 %v354, %v451
        %v484 = vadd.f32 %v355, %v452
        %v485 = vadd.f32 %v356, %v453
        %v486 = vadd.f32 %v357, %v454
        %v487 = vadd.f32 %v358, %v455
        %v488 = vadd.f32 %v359, %v456
        %v489 = vadd.f32 %v360, %v457
        %v490 = vadd.f32 %v361, %v458
        %v491 = vadd.f32 %v362, %v459
        %v492 = vadd.f32 %v363, %v460
        %v493 = vadd.f32 %v364, %v461
        %v494 = vadd.f32 %v365, %v462
        %v495 = vadd.f32 %v366, %v463
        %v496 = vadd.f32 %v367, %v464
        %v497 = vadd.f32 %v368, %v465
        %v498 = vadd.f32 %v369, %v466
        %v499 = vmul.f32 %v435, %v435
        %v500 = vmul.f32 %v436, %v436
        %v501 = vmul.f32 %v437, %v437
        %v502 = vmul.f32 %v438, %v438
        %v503 = vmul.f32 %v439, %v439
        %v504 = vmul.f32 %v440, %v440
        %v505 = vmul.f32 %v441, %v441
        %v506 = vmul.f32 %v442, %v442
        %v507 = vmul.f32 %v443, %v443
        %v508 = vmul.f32 %v444, %v444
        %v509 = vmul.f32 %v445, %v445
        %v510 = vmul.f32 %v446, %v446
        %v511 = vmul.f32 %v447, %v447
        %v512 = vmul.f32 %v448, %v448
        %v513 = vmul.f32 %v449, %v449
        %v514 = vmul.f32 %v450, %v450
        %v515 = vmul.f32 %v451, %v451
        %v516 = vmul.f32 %v452, %v452
        %v517 = vmul.f32 %v453, %v453
        %v518 = vmul.f32 %v454, %v454
        %v519 = vmul.f32 %v455, %v455
        %v520 = vmul.f32 %v456, %v456
        %v521 = vmul.f32 %v457, %v457
        %v522 = vmul.f32 %v458, %v458
        %v523 = vmul.f32 %v459, %v459
        %v524 = vmul.f32 %v460, %v460
        %v525 = vmul.f32 %v461, %v461
        %v526 = vmul.f32 %v462, %v462
        %v527 = vmul.f32 %v463, %v463
        %v528 = vmul.f32 %v464, %v464
        %v529 = vmul.f32 %v465, %v465
        %v530 = vmul.f32 %v466, %v466
        %v531 = vadd.f32 %v402, %v499
        %v532 = vadd.f32 %v403, %v500
        %v533 = vadd.f32 %v404, %v501
        %v534 = vadd.f32 %v405, %v502
        %v535 = vadd.f32 %v406, %v503
        %v536 = vadd.f32 %v407, %v504
        %v537 = vadd.f32 %v408, %v505
        %v538 = vadd.f32 %v409, %v506
        %v539 = vadd.f32 %v410, %v507
        %v540 = vadd.f32 %v411, %v508
        %v541 = vadd.f32 %v412, %v509
        %v542 = vadd.f32 %v413, %v510
        %v543 = vadd.f32 %v414, %v511
        %v544 = vadd.f32 %v415, %v512
        %v545 = vadd.f32 %v416, %v513
        %v546 = vadd.f32 %v417, %v514
        %v547 = vadd.f32 %v418, %v515
        %v548 = vadd.f32 %v419, %v516
        %v549 = vadd.f32 %v420, %v517
        %v550 = vadd.f32 %v421, %v518
        %v551 = vadd.f32 %v422, %v519
        %v552 = vadd.f32 %v423, %v520
        %v553 = vadd.f32 %v424, %v521
        %v554 = vadd.f32 %v425, %v522
        %v555 = vadd.f32 %v426, %v523
        %v556 = vadd.f32 %v427, %v524
        %v557 = vadd.f32 %v428, %v525
        %v558 = vadd.f32 %v429, %v526
        %v559 = vadd.f32 %v430, %v527
        %v560 = vadd.f32 %v431, %v528
        %v561 = vadd.f32 %v432, %v529
        %v562 = vadd.f32 %v433, %v530
        %s563 = scalar_lea.vmem %s205, 136 [#allocation2]
        %v564 = vld [vmem:[%s563] sm:$0xff]
        %v565 = vld [vmem:[%s563 + $0x10] sm:$0xff]
        %v566 = vld [vmem:[%s563 + $0x20] sm:$0xff]
        %v567 = vld [vmem:[%s563 + $0x30] sm:$0xff]
        %v568 = vld [vmem:[%s563 + $0x40] sm:$0xff]
        %v569 = vld [vmem:[%s563 + $0x50] sm:$0xff]
        %v570 = vld [vmem:[%s563 + $0x60] sm:$0xff]
        %v571 = vld [vmem:[%s563 + $0x70] sm:$0xff]
        %v572 = vld [vmem:[%s563 + $0x100] sm:$0xff]
        %v573 = vld [vmem:[%s563 + $0x110] sm:$0xff]
        %v574 = vld [vmem:[%s563 + $0x120] sm:$0xff]
        %v575 = vld [vmem:[%s563 + $0x130] sm:$0xff]
        %v576 = vld [vmem:[%s563 + $0x140] sm:$0xff]
        %v577 = vld [vmem:[%s563 + $0x150] sm:$0xff]
        %v578 = vld [vmem:[%s563 + $0x160] sm:$0xff]
        %v579 = vld [vmem:[%s563 + $0x170] sm:$0xff]
        %v580 = vld [vmem:[%s563 + $0x200] sm:$0xff]
        %v581 = vld [vmem:[%s563 + $0x210] sm:$0xff]
        %v582 = vld [vmem:[%s563 + $0x220] sm:$0xff]
        %v583 = vld [vmem:[%s563 + $0x230] sm:$0xff]
        %v584 = vld [vmem:[%s563 + $0x240] sm:$0xff]
        %v585 = vld [vmem:[%s563 + $0x250] sm:$0xff]
        %v586 = vld [vmem:[%s563 + $0x260] sm:$0xff]
        %v587 = vld [vmem:[%s563 + $0x270] sm:$0xff]
        %v588 = vld [vmem:[%s563 + $0x300] sm:$0xff]
        %v589 = vld [vmem:[%s563 + $0x310] sm:$0xff]
        %v590 = vld [vmem:[%s563 + $0x320] sm:$0xff]
        %v591 = vld [vmem:[%s563 + $0x330] sm:$0xff]
        %v592 = vld [vmem:[%s563 + $0x340] sm:$0xff]
        %v593 = vld [vmem:[%s563 + $0x350] sm:$0xff]
        %v594 = vld [vmem:[%s563 + $0x360] sm:$0xff]
        %v595 = vld [vmem:[%s563 + $0x370] sm:$0xff]
        %v596 = vadd.f32 %v467, %v564
        %v597 = vadd.f32 %v468, %v565
        %v598 = vadd.f32 %v469, %v566
        %v599 = vadd.f32 %v470, %v567
        %v600 = vadd.f32 %v471, %v568
        %v601 = vadd.f32 %v472, %v569
        %v602 = vadd.f32 %v473, %v570
        %v603 = vadd.f32 %v474, %v571
        %v604 = vadd.f32 %v475, %v572
        %v605 = vadd.f32 %v476, %v573
        %v606 = vadd.f32 %v477, %v574
        %v607 = vadd.f32 %v478, %v575
        %v608 = vadd.f32 %v479, %v576
        %v609 = vadd.f32 %v480, %v577
        %v610 = vadd.f32 %v481, %v578
        %v611 = vadd.f32 %v482, %v579
        %v612 = vadd.f32 %v483, %v580
        %v613 = vadd.f32 %v484, %v581
        %v614 = vadd.f32 %v485, %v582
        %v615 = vadd.f32 %v486, %v583
        %v616 = vadd.f32 %v487, %v584
        %v617 = vadd.f32 %v488, %v585
        %v618 = vadd.f32 %v489, %v586
        %v619 = vadd.f32 %v490, %v587
        %v620 = vadd.f32 %v491, %v588
        %v621 = vadd.f32 %v492, %v589
        %v622 = vadd.f32 %v493, %v590
        %v623 = vadd.f32 %v494, %v591
        %v624 = vadd.f32 %v495, %v592
        %v625 = vadd.f32 %v496, %v593
        %v626 = vadd.f32 %v497, %v594
        %v627 = vadd.f32 %v498, %v595
        %v628 = vmul.f32 %v564, %v564
        %v629 = vmul.f32 %v565, %v565
        %v630 = vmul.f32 %v566, %v566
        %v631 = vmul.f32 %v567, %v567
        %v632 = vmul.f32 %v568, %v568
        %v633 = vmul.f32 %v569, %v569
        %v634 = vmul.f32 %v570, %v570
        %v635 = vmul.f32 %v571, %v571
        %v636 = vmul.f32 %v572, %v572
        %v637 = vmul.f32 %v573, %v573
        %v638 = vmul.f32 %v574, %v574
        %v639 = vmul.f32 %v575, %v575
        %v640 = vmul.f32 %v576, %v576
        %v641 = vmul.f32 %v577, %v577
        %v642 = vmul.f32 %v578, %v578
        %v643 = vmul.f32 %v579, %v579
        %v644 = vmul.f32 %v580, %v580
        %v645 = vmul.f32 %v581, %v581
        %v646 = vmul.f32 %v582, %v582
        %v647 = vmul.f32 %v583, %v583
        %v648 = vmul.f32 %v584, %v584
        %v649 = vmul.f32 %v585, %v585
        %v650 = vmul.f32 %v586, %v586
        %v651 = vmul.f32 %v587, %v587
        %v652 = vmul.f32 %v588, %v588
        %v653 = vmul.f32 %v589, %v589
        %v654 = vmul.f32 %v590, %v590
        %v655 = vmul.f32 %v591, %v591
        %v656 = vmul.f32 %v592, %v592
        %v657 = vmul.f32 %v593, %v593
        %v658 = vmul.f32 %v594, %v594
        %v659 = vmul.f32 %v595, %v595
        %v660 = vadd.f32 %v531, %v628
        %v661 = vadd.f32 %v532, %v629
        %v662 = vadd.f32 %v533, %v630
        %v663 = vadd.f32 %v534, %v631
        %v664 = vadd.f32 %v535, %v632
        %v665 = vadd.f32 %v536, %v633
        %v666 = vadd.f32 %v537, %v634
        %v667 = vadd.f32 %v538, %v635
        %v668 = vadd.f32 %v539, %v636
        %v669 = vadd.f32 %v540, %v637
        %v670 = vadd.f32 %v541, %v638
        %v671 = vadd.f32 %v542, %v639
        %v672 = vadd.f32 %v543, %v640
        %v673 = vadd.f32 %v544, %v641
        %v674 = vadd.f32 %v545, %v642
        %v675 = vadd.f32 %v546, %v643
        %v676 = vadd.f32 %v547, %v644
        %v677 = vadd.f32 %v548, %v645
        %v678 = vadd.f32 %v549, %v646
        %v679 = vadd.f32 %v550, %v647
        %v680 = vadd.f32 %v551, %v648
        %v681 = vadd.f32 %v552, %v649
        %v682 = vadd.f32 %v553, %v650
        %v683 = vadd.f32 %v554, %v651
        %v684 = vadd.f32 %v555, %v652
        %v685 = vadd.f32 %v556, %v653
        %v686 = vadd.f32 %v557, %v654
        %v687 = vadd.f32 %v558, %v655
        %v688 = vadd.f32 %v559, %v656
        %v689 = vadd.f32 %v560, %v657
        %v690 = vadd.f32 %v561, %v658
        %v691 = vadd.f32 %v562, %v659
        %vm692 = vcmask 523264
        %v693 = vsel %vm692, %v596, 0.0
        %694 = vadd.xlane.f32.xlu0 %v693
        %v695 = vpop.xlane.xlu0 %694
        %v696 = vsel %vm692, %v597, 0.0
        %697 = vadd.xlane.f32.xlu0 %v696
        %v698 = vpop.xlane.xlu0 %697
        %v699 = vsel %vm692, %v598, 0.0
        %700 = vadd.xlane.f32.xlu0 %v699
        %v701 = vpop.xlane.xlu0 %700
        %v702 = vsel %vm692, %v599, 0.0
        %703 = vadd.xlane.f32.xlu0 %v702
        %v704 = vpop.xlane.xlu0 %703
        %v705 = vsel %vm692, %v600, 0.0
        %706 = vadd.xlane.f32.xlu0 %v705
        %v707 = vpop.xlane.xlu0 %706
        %v708 = vsel %vm692, %v601, 0.0
        %709 = vadd.xlane.f32.xlu0 %v708
        %v710 = vpop.xlane.xlu0 %709
        %v711 = vsel %vm692, %v602, 0.0
        %712 = vadd.xlane.f32.xlu0 %v711
        %v713 = vpop.xlane.xlu0 %712
        %v714 = vsel %vm692, %v603, 0.0
        %715 = vadd.xlane.f32.xlu0 %v714
        %v716 = vpop.xlane.xlu0 %715
        %v717 = vsel %vm692, %v604, 0.0
        %718 = vadd.xlane.f32.xlu0 %v717
        %v719 = vpop.xlane.xlu0 %718
        %v720 = vsel %vm692, %v605, 0.0
        %721 = vadd.xlane.f32.xlu0 %v720
        %v722 = vpop.xlane.xlu0 %721
        %v723 = vsel %vm692, %v606, 0.0
        %724 = vadd.xlane.f32.xlu0 %v723
        %v725 = vpop.xlane.xlu0 %724
        %v726 = vsel %vm692, %v607, 0.0
        %727 = vadd.xlane.f32.xlu0 %v726
        %v728 = vpop.xlane.xlu0 %727
        %v729 = vsel %vm692, %v608, 0.0
        %730 = vadd.xlane.f32.xlu0 %v729
        %v731 = vpop.xlane.xlu0 %730
        %v732 = vsel %vm692, %v609, 0.0
        %733 = vadd.xlane.f32.xlu0 %v732
        %v734 = vpop.xlane.xlu0 %733
        %v735 = vsel %vm692, %v610, 0.0
        %736 = vadd.xlane.f32.xlu0 %v735
        %v737 = vpop.xlane.xlu0 %736
        %v738 = vsel %vm692, %v611, 0.0
        %739 = vadd.xlane.f32.xlu0 %v738
        %v740 = vpop.xlane.xlu0 %739
        %v741 = vsel %vm692, %v612, 0.0
        %742 = vadd.xlane.f32.xlu0 %v741
        %v743 = vpop.xlane.xlu0 %742
        %v744 = vsel %vm692, %v613, 0.0
        %745 = vadd.xlane.f32.xlu0 %v744
        %v746 = vpop.xlane.xlu0 %745
        %v747 = vsel %vm692, %v614, 0.0
        %748 = vadd.xlane.f32.xlu0 %v747
        %v749 = vpop.xlane.xlu0 %748
        %v750 = vsel %vm692, %v615, 0.0
        %751 = vadd.xlane.f32.xlu0 %v750
        %v752 = vpop.xlane.xlu0 %751
        %v753 = vsel %vm692, %v616, 0.0
        %754 = vadd.xlane.f32.xlu0 %v753
        %v755 = vpop.xlane.xlu0 %754
        %v756 = vsel %vm692, %v617, 0.0
        %757 = vadd.xlane.f32.xlu0 %v756
        %v758 = vpop.xlane.xlu0 %757
        %v759 = vsel %vm692, %v618, 0.0
        %760 = vadd.xlane.f32.xlu0 %v759
        %v761 = vpop.xlane.xlu0 %760
        %v762 = vsel %vm692, %v619, 0.0
        %763 = vadd.xlane.f32.xlu0 %v762
        %v764 = vpop.xlane.xlu0 %763
        %v765 = vsel %vm692, %v620, 0.0
        %766 = vadd.xlane.f32.xlu0 %v765
        %v767 = vpop.xlane.xlu0 %766
        %v768 = vsel %vm692, %v621, 0.0
        %769 = vadd.xlane.f32.xlu0 %v768
        %v770 = vpop.xlane.xlu0 %769
        %v771 = vsel %vm692, %v622, 0.0
        %772 = vadd.xlane.f32.xlu0 %v771
        %v773 = vpop.xlane.xlu0 %772
        %v774 = vsel %vm692, %v623, 0.0
        %775 = vadd.xlane.f32.xlu0 %v774
        %v776 = vpop.xlane.xlu0 %775
        %v777 = vsel %vm692, %v624, 0.0
        %778 = vadd.xlane.f32.xlu0 %v777
        %v779 = vpop.xlane.xlu0 %778
        %v780 = vsel %vm692, %v625, 0.0
        %781 = vadd.xlane.f32.xlu0 %v780
        %v782 = vpop.xlane.xlu0 %781
        %v783 = vsel %vm692, %v626, 0.0
        %784 = vadd.xlane.f32.xlu0 %v783
        %v785 = vpop.xlane.xlu0 %784
        %v786 = vsel %vm692, %v627, 0.0
        %787 = vadd.xlane.f32.xlu0 %v786
        %v788 = vpop.xlane.xlu0 %787
        %v789 = vmul.f32 %v695, 0.00390625
        %v790 = vmul.f32 %v698, 0.00390625
        %v791 = vmul.f32 %v701, 0.00390625
        %v792 = vmul.f32 %v704, 0.00390625
        %v793 = vmul.f32 %v707, 0.00390625
        %v794 = vmul.f32 %v710, 0.00390625
        %v795 = vmul.f32 %v713, 0.00390625
        %v796 = vmul.f32 %v716, 0.00390625
        %v797 = vmul.f32 %v719, 0.00390625
        %v798 = vmul.f32 %v722, 0.00390625
        %v799 = vmul.f32 %v725, 0.00390625
        %v800 = vmul.f32 %v728, 0.00390625
        %v801 = vmul.f32 %v731, 0.00390625
        %v802 = vmul.f32 %v734, 0.00390625
        %v803 = vmul.f32 %v737, 0.00390625
        %v804 = vmul.f32 %v740, 0.00390625
        %v805 = vmul.f32 %v743, 0.00390625
        %v806 = vmul.f32 %v746, 0.00390625
        %v807 = vmul.f32 %v749, 0.00390625
        %v808 = vmul.f32 %v752, 0.00390625
        %v809 = vmul.f32 %v755, 0.00390625
        %v810 = vmul.f32 %v758, 0.00390625
        %v811 = vmul.f32 %v761, 0.00390625
        %v812 = vmul.f32 %v764, 0.00390625
        %v813 = vmul.f32 %v767, 0.00390625
        %v814 = vmul.f32 %v770, 0.00390625
        %v815 = vmul.f32 %v773, 0.00390625
        %v816 = vmul.f32 %v776, 0.00390625
        %v817 = vmul.f32 %v779, 0.00390625
        %v818 = vmul.f32 %v782, 0.00390625
        %v819 = vmul.f32 %v785, 0.00390625
        %v820 = vmul.f32 %v788, 0.00390625
        %v821 = vsel %vm692, %v660, 0.0
        %822 = vadd.xlane.f32.xlu0 %v821
        %v823 = vpop.xlane.xlu0 %822
        %v824 = vsel %vm692, %v661, 0.0
        %825 = vadd.xlane.f32.xlu0 %v824
        %v826 = vpop.xlane.xlu0 %825
        %v827 = vsel %vm692, %v662, 0.0
        %828 = vadd.xlane.f32.xlu0 %v827
        %v829 = vpop.xlane.xlu0 %828
        %v830 = vsel %vm692, %v663, 0.0
        %831 = vadd.xlane.f32.xlu0 %v830
        %v832 = vpop.xlane.xlu0 %831
        %v833 = vsel %vm692, %v664, 0.0
        %834 = vadd.xlane.f32.xlu0 %v833
        %v835 = vpop.xlane.xlu0 %834
        %v836 = vsel %vm692, %v665, 0.0
        %837 = vadd.xlane.f32.xlu0 %v836
        %v838 = vpop.xlane.xlu0 %837
        %v839 = vsel %vm692, %v666, 0.0
        %840 = vadd.xlane.f32.xlu0 %v839
        %v841 = vpop.xlane.xlu0 %840
        %v842 = vsel %vm692, %v667, 0.0
        %843 = vadd.xlane.f32.xlu0 %v842
        %v844 = vpop.xlane.xlu0 %843
        %v845 = vsel %vm692, %v668, 0.0
        %846 = vadd.xlane.f32.xlu0 %v845
        %v847 = vpop.xlane.xlu0 %846
        %v848 = vsel %vm692, %v669, 0.0
        %849 = vadd.xlane.f32.xlu0 %v848
        %v850 = vpop.xlane.xlu0 %849
        %v851 = vsel %vm692, %v670, 0.0
        %852 = vadd.xlane.f32.xlu0 %v851
        %v853 = vpop.xlane.xlu0 %852
        %v854 = vsel %vm692, %v671, 0.0
        %855 = vadd.xlane.f32.xlu0 %v854
        %v856 = vpop.xlane.xlu0 %855
        %v857 = vsel %vm692, %v672, 0.0
        %858 = vadd.xlane.f32.xlu0 %v857
        %v859 = vpop.xlane.xlu0 %858
        %v860 = vsel %vm692, %v673, 0.0
        %861 = vadd.xlane.f32.xlu0 %v860
        %v862 = vpop.xlane.xlu0 %861
        %v863 = vsel %vm692, %v674, 0.0
        %864 = vadd.xlane.f32.xlu0 %v863
        %v865 = vpop.xlane.xlu0 %864
        %v866 = vsel %vm692, %v675, 0.0
        %867 = vadd.xlane.f32.xlu0 %v866
        %v868 = vpop.xlane.xlu0 %867
        %v869 = vsel %vm692, %v676, 0.0
        %870 = vadd.xlane.f32.xlu0 %v869
        %v871 = vpop.xlane.xlu0 %870
        %v872 = vsel %vm692, %v677, 0.0
        %873 = vadd.xlane.f32.xlu0 %v872
        %v874 = vpop.xlane.xlu0 %873
        %v875 = vsel %vm692, %v678, 0.0
        %876 = vadd.xlane.f32.xlu0 %v875
        %v877 = vpop.xlane.xlu0 %876
        %v878 = vsel %vm692, %v679, 0.0
        %879 = vadd.xlane.f32.xlu0 %v878
        %v880 = vpop.xlane.xlu0 %879
        %v881 = vsel %vm692, %v680, 0.0
        %882 = vadd.xlane.f32.xlu0 %v881
        %v883 = vpop.xlane.xlu0 %882
        %v884 = vsel %vm692, %v681, 0.0
        %885 = vadd.xlane.f32.xlu0 %v884
        %v886 = vpop.xlane.xlu0 %885
        %v887 = vsel %vm692, %v682, 0.0
        %888 = vadd.xlane.f32.xlu0 %v887
        %v889 = vpop.xlane.xlu0 %888
        %v890 = vsel %vm692, %v683, 0.0
        %891 = vadd.xlane.f32.xlu0 %v890
        %v892 = vpop.xlane.xlu0 %891
        %v893 = vsel %vm692, %v684, 0.0
        %894 = vadd.xlane.f32.xlu0 %v893
        %v895 = vpop.xlane.xlu0 %894
        %v896 = vsel %vm692, %v685, 0.0
        %897 = vadd.xlane.f32.xlu0 %v896
        %v898 = vpop.xlane.xlu0 %897
        %v899 = vsel %vm692, %v686, 0.0
        %900 = vadd.xlane.f32.xlu0 %v899
        %v901 = vpop.xlane.xlu0 %900
        %v902 = vsel %vm692, %v687, 0.0
        %903 = vadd.xlane.f32.xlu0 %v902
        %v904 = vpop.xlane.xlu0 %903
        %v905 = vsel %vm692, %v688, 0.0
        %906 = vadd.xlane.f32.xlu0 %v905
        %v907 = vpop.xlane.xlu0 %906
        %v908 = vsel %vm692, %v689, 0.0
        %909 = vadd.xlane.f32.xlu0 %v908
        %v910 = vpop.xlane.xlu0 %909
        %v911 = vsel %vm692, %v690, 0.0
        %912 = vadd.xlane.f32.xlu0 %v911
        %v913 = vpop.xlane.xlu0 %912
        %v914 = vsel %vm692, %v691, 0.0
        %915 = vadd.xlane.f32.xlu0 %v914
        %v916 = vpop.xlane.xlu0 %915
        %v917 = vmul.f32 %v823, 0.00390625
        %v918 = vmul.f32 %v826, 0.00390625
        %v919 = vmul.f32 %v829, 0.00390625
        %v920 = vmul.f32 %v832, 0.00390625
        %v921 = vmul.f32 %v835, 0.00390625
        %v922 = vmul.f32 %v838, 0.00390625
        %v923 = vmul.f32 %v841, 0.00390625
        %v924 = vmul.f32 %v844, 0.00390625
        %v925 = vmul.f32 %v847, 0.00390625
        %v926 = vmul.f32 %v850, 0.00390625
        %v927 = vmul.f32 %v853, 0.00390625
        %v928 = vmul.f32 %v856, 0.00390625
        %v929 = vmul.f32 %v859, 0.00390625
        %v930 = vmul.f32 %v862, 0.00390625
        %v931 = vmul.f32 %v865, 0.00390625
        %v932 = vmul.f32 %v868, 0.00390625
        %v933 = vmul.f32 %v871, 0.00390625
        %v934 = vmul.f32 %v874, 0.00390625
        %v935 = vmul.f32 %v877, 0.00390625
        %v936 = vmul.f32 %v880, 0.00390625
        %v937 = vmul.f32 %v883, 0.00390625
        %v938 = vmul.f32 %v886, 0.00390625
        %v939 = vmul.f32 %v889, 0.00390625
        %v940 = vmul.f32 %v892, 0.00390625
        %v941 = vmul.f32 %v895, 0.00390625
        %v942 = vmul.f32 %v898, 0.00390625
        %v943 = vmul.f32 %v901, 0.00390625
        %v944 = vmul.f32 %v904, 0.00390625
        %v945 = vmul.f32 %v907, 0.00390625
        %v946 = vmul.f32 %v910, 0.00390625
        %v947 = vmul.f32 %v913, 0.00390625
        %v948 = vmul.f32 %v916, 0.00390625
        %v949 = vmul.f32 %v789, %v789
        %v950 = vmul.f32 %v790, %v790
        %v951 = vmul.f32 %v791, %v791
        %v952 = vmul.f32 %v792, %v792
        %v953 = vmul.f32 %v793, %v793
        %v954 = vmul.f32 %v794, %v794
        %v955 = vmul.f32 %v795, %v795
        %v956 = vmul.f32 %v796, %v796
        %v957 = vmul.f32 %v797, %v797
        %v958 = vmul.f32 %v798, %v798
        %v959 = vmul.f32 %v799, %v799
        %v960 = vmul.f32 %v800, %v800
        %v961 = vmul.f32 %v801, %v801
        %v962 = vmul.f32 %v802, %v802
        %v963 = vmul.f32 %v803, %v803
        %v964 = vmul.f32 %v804, %v804
        %v965 = vmul.f32 %v805, %v805
        %v966 = vmul.f32 %v806, %v806
        %v967 = vmul.f32 %v807, %v807
        %v968 = vmul.f32 %v808, %v808
        %v969 = vmul.f32 %v809, %v809
        %v970 = vmul.f32 %v810, %v810
        %v971 = vmul.f32 %v811, %v811
        %v972 = vmul.f32 %v812, %v812
        %v973 = vmul.f32 %v813, %v813
        %v974 = vmul.f32 %v814, %v814
        %v975 = vmul.f32 %v815, %v815
        %v976 = vmul.f32 %v816, %v816
        %v977 = vmul.f32 %v817, %v817
        %v978 = vmul.f32 %v818, %v818
        %v979 = vmul.f32 %v819, %v819
        %v980 = vmul.f32 %v820, %v820
        %v981 = vsub.f32 %v917, %v949
        %v982 = vsub.f32 %v918, %v950
        %v983 = vsub.f32 %v919, %v951
        %v984 = vsub.f32 %v920, %v952
        %v985 = vsub.f32 %v921, %v953
        %v986 = vsub.f32 %v922, %v954
        %v987 = vsub.f32 %v923, %v955
        %v988 = vsub.f32 %v924, %v956
        %v989 = vsub.f32 %v925, %v957
        %v990 = vsub.f32 %v926, %v958
        %v991 = vsub.f32 %v927, %v959
        %v992 = vsub.f32 %v928, %v960
        %v993 = vsub.f32 %v929, %v961
        %v994 = vsub.f32 %v930, %v962
        %v995 = vsub.f32 %v931, %v963
        %v996 = vsub.f32 %v932, %v964
        %v997 = vsub.f32 %v933, %v965
        %v998 = vsub.f32 %v934, %v966
        %v999 = vsub.f32 %v935, %v967
        %v1000 = vsub.f32 %v936, %v968
        %v1001 = vsub.f32 %v937, %v969
        %v1002 = vsub.f32 %v938, %v970
        %v1003 = vsub.f32 %v939, %v971
        %v1004 = vsub.f32 %v940, %v972
        %v1005 = vsub.f32 %v941, %v973
        %v1006 = vsub.f32 %v942, %v974
        %v1007 = vsub.f32 %v943, %v975
        %v1008 = vsub.f32 %v944, %v976
        %v1009 = vsub.f32 %v945, %v977
        %v1010 = vsub.f32 %v946, %v978
        %v1011 = vsub.f32 %v947, %v979
        %v1012 = vsub.f32 %v948, %v980
        %v1013 = vmax.f32 %v981, 0.0
        %v1014 = vmax.f32 %v982, 0.0
        %v1015 = vmax.f32 %v983, 0.0
        %v1016 = vmax.f32 %v984, 0.0
        %v1017 = vmax.f32 %v985, 0.0
        %v1018 = vmax.f32 %v986, 0.0
        %v1019 = vmax.f32 %v987, 0.0
        %v1020 = vmax.f32 %v988, 0.0
        %v1021 = vmax.f32 %v989, 0.0
        %v1022 = vmax.f32 %v990, 0.0
        %v1023 = vmax.f32 %v991, 0.0
        %v1024 = vmax.f32 %v992, 0.0
        %v1025 = vmax.f32 %v993, 0.0
        %v1026 = vmax.f32 %v994, 0.0
        %v1027 = vmax.f32 %v995, 0.0
        %v1028 = vmax.f32 %v996, 0.0
        %v1029 = vmax.f32 %v997, 0.0
        %v1030 = vmax.f32 %v998, 0.0
        %v1031 = vmax.f32 %v999, 0.0
        %v1032 = vmax.f32 %v1000, 0.0
        %v1033 = vmax.f32 %v1001, 0.0
        %v1034 = vmax.f32 %v1002, 0.0
        %v1035 = vmax.f32 %v1003, 0.0
        %v1036 = vmax.f32 %v1004, 0.0
        %v1037 = vmax.f32 %v1005, 0.0
        %v1038 = vmax.f32 %v1006, 0.0
        %v1039 = vmax.f32 %v1007, 0.0
        %v1040 = vmax.f32 %v1008, 0.0
        %v1041 = vmax.f32 %v1009, 0.0
        %v1042 = vmax.f32 %v1010, 0.0
        %v1043 = vmax.f32 %v1011, 0.0
        %v1044 = vmax.f32 %v1012, 0.0
        %v1045 = vadd.f32 %v1013, 1e-05
        %v1046 = vadd.f32 %v1014, 1e-05
        %v1047 = vadd.f32 %v1015, 1e-05
        %v1048 = vadd.f32 %v1016, 1e-05
        %v1049 = vadd.f32 %v1017, 1e-05
        %v1050 = vadd.f32 %v1018, 1e-05
        %v1051 = vadd.f32 %v1019, 1e-05
        %v1052 = vadd.f32 %v1020, 1e-05
        %v1053 = vadd.f32 %v1021, 1e-05
        %v1054 = vadd.f32 %v1022, 1e-05
        %v1055 = vadd.f32 %v1023, 1e-05
        %v1056 = vadd.f32 %v1024, 1e-05
        %v1057 = vadd.f32 %v1025, 1e-05
        %v1058 = vadd.f32 %v1026, 1e-05
        %v1059 = vadd.f32 %v1027, 1e-05
        %v1060 = vadd.f32 %v1028, 1e-05
        %v1061 = vadd.f32 %v1029, 1e-05
        %v1062 = vadd.f32 %v1030, 1e-05
        %v1063 = vadd.f32 %v1031, 1e-05
        %v1064 = vadd.f32 %v1032, 1e-05
        %v1065 = vadd.f32 %v1033, 1e-05
        %v1066 = vadd.f32 %v1034, 1e-05
        %v1067 = vadd.f32 %v1035, 1e-05
        %v1068 = vadd.f32 %v1036, 1e-05
        %v1069 = vadd.f32 %v1037, 1e-05
        %v1070 = vadd.f32 %v1038, 1e-05
        %v1071 = vadd.f32 %v1039, 1e-05
        %v1072 = vadd.f32 %v1040, 1e-05
        %v1073 = vadd.f32 %v1041, 1e-05
        %v1074 = vadd.f32 %v1042, 1e-05
        %v1075 = vadd.f32 %v1043, 1e-05
        %v1076 = vadd.f32 %v1044, 1e-05
        %v1077 = vrsqrt.pop %v1045
        %v1078 = vrsqrt.pop %v1046
        %v1079 = vrsqrt.pop %v1047
        %v1080 = vrsqrt.pop %v1048
        %v1081 = vrsqrt.pop %v1049
        %v1082 = vrsqrt.pop %v1050
        %v1083 = vrsqrt.pop %v1051
        %v1084 = vrsqrt.pop %v1052
        %v1085 = vrsqrt.pop %v1053
        %v1086 = vrsqrt.pop %v1054
        %v1087 = vrsqrt.pop %v1055
        %v1088 = vrsqrt.pop %v1056
        %v1089 = vrsqrt.pop %v1057
        %v1090 = vrsqrt.pop %v1058
        %v1091 = vrsqrt.pop %v1059
        %v1092 = vrsqrt.pop %v1060
        %v1093 = vrsqrt.pop %v1061
        %v1094 = vrsqrt.pop %v1062
        %v1095 = vrsqrt.pop %v1063
        %v1096 = vrsqrt.pop %v1064
        %v1097 = vrsqrt.pop %v1065
        %v1098 = vrsqrt.pop %v1066
        %v1099 = vrsqrt.pop %v1067
        %v1100 = vrsqrt.pop %v1068
        %v1101 = vrsqrt.pop %v1069
        %v1102 = vrsqrt.pop %v1070
        %v1103 = vrsqrt.pop %v1071
        %v1104 = vrsqrt.pop %v1072
        %v1105 = vrsqrt.pop %v1073
        %v1106 = vrsqrt.pop %v1074
        %v1107 = vrsqrt.pop %v1075
        %v1108 = vrsqrt.pop %v1076
        %v1109 = vsub.f32 %v241, %v789
        %v1110 = vsub.f32 %v242, %v790
        %v1111 = vsub.f32 %v243, %v791
        %v1112 = vsub.f32 %v244, %v792
        %v1113 = vsub.f32 %v245, %v793
        %v1114 = vsub.f32 %v246, %v794
        %v1115 = vsub.f32 %v247, %v795
        %v1116 = vsub.f32 %v248, %v796
        %v1117 = vsub.f32 %v249, %v797
        %v1118 = vsub.f32 %v250, %v798
        %v1119 = vsub.f32 %v251, %v799
        %v1120 = vsub.f32 %v252, %v800
        %v1121 = vsub.f32 %v253, %v801
        %v1122 = vsub.f32 %v254, %v802
        %v1123 = vsub.f32 %v255, %v803
        %v1124 = vsub.f32 %v256, %v804
        %v1125 = vsub.f32 %v257, %v805
        %v1126 = vsub.f32 %v258, %v806
        %v1127 = vsub.f32 %v259, %v807
        %v1128 = vsub.f32 %v260, %v808
        %v1129 = vsub.f32 %v261, %v809
        %v1130 = vsub.f32 %v262, %v810
        %v1131 = vsub.f32 %v263, %v811
        %v1132 = vsub.f32 %v264, %v812
        %v1133 = vsub.f32 %v265, %v813
        %v1134 = vsub.f32 %v266, %v814
        %v1135 = vsub.f32 %v267, %v815
        %v1136 = vsub.f32 %v268, %v816
        %v1137 = vsub.f32 %v269, %v817
        %v1138 = vsub.f32 %v270, %v818
        %v1139 = vsub.f32 %v271, %v819
        %v1140 = vsub.f32 %v272, %v820
        %v1141 = vmul.f32 %v1109, %v1077
        %v1142 = vmul.f32 %v1110, %v1078
        %v1143 = vmul.f32 %v1111, %v1079
        %v1144 = vmul.f32 %v1112, %v1080
        %v1145 = vmul.f32 %v1113, %v1081
        %v1146 = vmul.f32 %v1114, %v1082
        %v1147 = vmul.f32 %v1115, %v1083
        %v1148 = vmul.f32 %v1116, %v1084
        %v1149 = vmul.f32 %v1117, %v1085
        %v1150 = vmul.f32 %v1118, %v1086
        %v1151 = vmul.f32 %v1119, %v1087
        %v1152 = vmul.f32 %v1120, %v1088
        %v1153 = vmul.f32 %v1121, %v1089
        %v1154 = vmul.f32 %v1122, %v1090
        %v1155 = vmul.f32 %v1123, %v1091
        %v1156 = vmul.f32 %v1124, %v1092
        %v1157 = vmul.f32 %v1125, %v1093
        %v1158 = vmul.f32 %v1126, %v1094
        %v1159 = vmul.f32 %v1127, %v1095
        %v1160 = vmul.f32 %v1128, %v1096
        %v1161 = vmul.f32 %v1129, %v1097
        %v1162 = vmul.f32 %v1130, %v1098
        %v1163 = vmul.f32 %v1131, %v1099
        %v1164 = vmul.f32 %v1132, %v1100
        %v1165 = vmul.f32 %v1133, %v1101
        %v1166 = vmul.f32 %v1134, %v1102
        %v1167 = vmul.f32 %v1135, %v1103
        %v1168 = vmul.f32 %v1136, %v1104
        %v1169 = vmul.f32 %v1137, %v1105
        %v1170 = vmul.f32 %v1138, %v1106
        %v1171 = vmul.f32 %v1139, %v1107
        %v1172 = vmul.f32 %v1140, %v1108
        %v1173 = vpack.c.bf16 %v1141, %v1141
        %v1174 = vpack.c.bf16 %v1142, %v1142
        %v1175 = vpack.c.bf16 %v1143, %v1143
        %v1176 = vpack.c.bf16 %v1144, %v1144
        %v1177 = vpack.c.bf16 %v1145, %v1145
        %v1178 = vpack.c.bf16 %v1146, %v1146
        %v1179 = vpack.c.bf16 %v1147, %v1147
        %v1180 = vpack.c.bf16 %v1148, %v1148
        %v1181 = vpack.c.bf16 %v1149, %v1149
        %v1182 = vpack.c.bf16 %v1150, %v1150
        %v1183 = vpack.c.bf16 %v1151, %v1151
        %v1184 = vpack.c.bf16 %v1152, %v1152
        %v1185 = vpack.c.bf16 %v1153, %v1153
        %v1186 = vpack.c.bf16 %v1154, %v1154
        %v1187 = vpack.c.bf16 %v1155, %v1155
        %v1188 = vpack.c.bf16 %v1156, %v1156
        %v1189 = vpack.c.bf16 %v1157, %v1157
        %v1190 = vpack.c.bf16 %v1158, %v1158
        %v1191 = vpack.c.bf16 %v1159, %v1159
        %v1192 = vpack.c.bf16 %v1160, %v1160
        %v1193 = vpack.c.bf16 %v1161, %v1161
        %v1194 = vpack.c.bf16 %v1162, %v1162
        %v1195 = vpack.c.bf16 %v1163, %v1163
        %v1196 = vpack.c.bf16 %v1164, %v1164
        %v1197 = vpack.c.bf16 %v1165, %v1165
        %v1198 = vpack.c.bf16 %v1166, %v1166
        %v1199 = vpack.c.bf16 %v1167, %v1167
        %v1200 = vpack.c.bf16 %v1168, %v1168
        %v1201 = vpack.c.bf16 %v1169, %v1169
        %v1202 = vpack.c.bf16 %v1170, %v1170
        %v1203 = vpack.c.bf16 %v1171, %v1171
        %v1204 = vpack.c.bf16 %v1172, %v1172
        %v1205 = vld [vmem:[#allocation5] sm:$0xf]
        %v1206 = vld [vmem:[#allocation5 + $0x4] sm:$0xf]
        %v1207 = vld [vmem:[#allocation5 + $0x8] sm:$0xf]
        %v1208 = vld [vmem:[#allocation5 + $0xc] sm:$0xf]
        %v1209 = vld [vmem:[#allocation5 + $0x10] sm:$0xf]
        %v1210 = vld [vmem:[#allocation5 + $0x14] sm:$0xf]
        %v1211 = vld [vmem:[#allocation5 + $0x18] sm:$0xf]
        %v1212 = vld [vmem:[#allocation5 + $0x1c] sm:$0xf]
        %v1213 = vsub.f32 %v306, %v789
        %v1214 = vsub.f32 %v307, %v790
        %v1215 = vsub.f32 %v308, %v791
        %v1216 = vsub.f32 %v309, %v792
        %v1217 = vsub.f32 %v310, %v793
        %v1218 = vsub.f32 %v311, %v794
        %v1219 = vsub.f32 %v312, %v795
        %v1220 = vsub.f32 %v313, %v796
        %v1221 = vsub.f32 %v314, %v797
        %v1222 = vsub.f32 %v315, %v798
        %v1223 = vsub.f32 %v316, %v799
        %v1224 = vsub.f32 %v317, %v800
        %v1225 = vsub.f32 %v318, %v801
        %v1226 = vsub.f32 %v319, %v802
        %v1227 = vsub.f32 %v320, %v803
        %v1228 = vsub.f32 %v321, %v804
        %v1229 = vsub.f32 %v322, %v805
        %v1230 = vsub.f32 %v323, %v806
        %v1231 = vsub.f32 %v324, %v807
        %v1232 = vsub.f32 %v325, %v808
        %v1233 = vsub.f32 %v326, %v809
        %v1234 = vsub.f32 %v327, %v810
        %v1235 = vsub.f32 %v328, %v811
        %v1236 = vsub.f32 %v329, %v812
        %v1237 = vsub.f32 %v330, %v813
        %v1238 = vsub.f32 %v331, %v814
        %v1239 = vsub.f32 %v332, %v815
        %v1240 = vsub.f32 %v333, %v816
        %v1241 = vsub.f32 %v334, %v817
        %v1242 = vsub.f32 %v335, %v818
        %v1243 = vsub.f32 %v336, %v819
        %v1244 = vsub.f32 %v337, %v820
        %v1245 = vmul.f32 %v1213, %v1077
        %v1246 = vmul.f32 %v1214, %v1078
        %v1247 = vmul.f32 %v1215, %v1079
        %v1248 = vmul.f32 %v1216, %v1080
        %v1249 = vmul.f32 %v1217, %v1081
        %v1250 = vmul.f32 %v1218, %v1082
        %v1251 = vmul.f32 %v1219, %v1083
        %v1252 = vmul.f32 %v1220, %v1084
        %v1253 = vmul.f32 %v1221, %v1085
        %v1254 = vmul.f32 %v1222, %v1086
        %v1255 = vmul.f32 %v1223, %v1087
        %v1256 = vmul.f32 %v1224, %v1088
        %v1257 = vmul.f32 %v1225, %v1089
        %v1258 = vmul.f32 %v1226, %v1090
        %v1259 = vmul.f32 %v1227, %v1091
        %v1260 = vmul.f32 %v1228, %v1092
        %v1261 = vmul.f32 %v1229, %v1093
        %v1262 = vmul.f32 %v1230, %v1094
        %v1263 = vmul.f32 %v1231, %v1095
        %v1264 = vmul.f32 %v1232, %v1096
        %v1265 = vmul.f32 %v1233, %v1097
        %v1266 = vmul.f32 %v1234, %v1098
        %v1267 = vmul.f32 %v1235, %v1099
        %v1268 = vmul.f32 %v1236, %v1100
        %v1269 = vmul.f32 %v1237, %v1101
        %v1270 = vmul.f32 %v1238, %v1102
        %v1271 = vmul.f32 %v1239, %v1103
        %v1272 = vmul.f32 %v1240, %v1104
        %v1273 = vmul.f32 %v1241, %v1105
        %v1274 = vmul.f32 %v1242, %v1106
        %v1275 = vmul.f32 %v1243, %v1107
        %v1276 = vmul.f32 %v1244, %v1108
        %v1277 = vpack.c.bf16 %v1245, %v1245
        %v1278 = vpack.c.bf16 %v1246, %v1246
        %v1279 = vpack.c.bf16 %v1247, %v1247
        %v1280 = vpack.c.bf16 %v1248, %v1248
        %v1281 = vpack.c.bf16 %v1249, %v1249
        %v1282 = vpack.c.bf16 %v1250, %v1250
        %v1283 = vpack.c.bf16 %v1251, %v1251
        %v1284 = vpack.c.bf16 %v1252, %v1252
        %v1285 = vpack.c.bf16 %v1253, %v1253
        %v1286 = vpack.c.bf16 %v1254, %v1254
        %v1287 = vpack.c.bf16 %v1255, %v1255
        %v1288 = vpack.c.bf16 %v1256, %v1256
        %v1289 = vpack.c.bf16 %v1257, %v1257
        %v1290 = vpack.c.bf16 %v1258, %v1258
        %v1291 = vpack.c.bf16 %v1259, %v1259
        %v1292 = vpack.c.bf16 %v1260, %v1260
        %v1293 = vpack.c.bf16 %v1261, %v1261
        %v1294 = vpack.c.bf16 %v1262, %v1262
        %v1295 = vpack.c.bf16 %v1263, %v1263
        %v1296 = vpack.c.bf16 %v1264, %v1264
        %v1297 = vpack.c.bf16 %v1265, %v1265
        %v1298 = vpack.c.bf16 %v1266, %v1266
        %v1299 = vpack.c.bf16 %v1267, %v1267
        %v1300 = vpack.c.bf16 %v1268, %v1268
        %v1301 = vpack.c.bf16 %v1269, %v1269
        %v1302 = vpack.c.bf16 %v1270, %v1270
        %v1303 = vpack.c.bf16 %v1271, %v1271
        %v1304 = vpack.c.bf16 %v1272, %v1272
        %v1305 = vpack.c.bf16 %v1273, %v1273
        %v1306 = vpack.c.bf16 %v1274, %v1274
        %v1307 = vpack.c.bf16 %v1275, %v1275
        %v1308 = vpack.c.bf16 %v1276, %v1276
        %s1309 = scalar_lea.vmem [#allocation5], 32
        %v1310 = vld [vmem:[%s1309] sm:$0xf]
        %v1311 = vld [vmem:[%s1309 + $0x4] sm:$0xf]
        %v1312 = vld [vmem:[%s1309 + $0x8] sm:$0xf]
        %v1313 = vld [vmem:[%s1309 + $0xc] sm:$0xf]
        %v1314 = vld [vmem:[%s1309 + $0x10] sm:$0xf]
        %v1315 = vld [vmem:[%s1309 + $0x14] sm:$0xf]
        %v1316 = vld [vmem:[%s1309 + $0x18] sm:$0xf]
        %v1317 = vld [vmem:[%s1309 + $0x1c] sm:$0xf]
        %v1350 = vunpack.c.l.b16 %v1277
        %v1351 = vunpack.c.l.b16 %v1278
        %v1352 = vunpack.c.l.b16 %v1279
        %v1353 = vunpack.c.l.b16 %v1280
        %v1354 = vunpack.c.l.b16 %v1281
        %v1355 = vunpack.c.l.b16 %v1282
        %v1356 = vunpack.c.l.b16 %v1283
        %v1357 = vunpack.c.l.b16 %v1284
        %v1358 = vunpack.c.l.b16 %v1285
        %v1359 = vunpack.c.l.b16 %v1286
        %v1360 = vunpack.c.l.b16 %v1287
        %v1361 = vunpack.c.l.b16 %v1288
        %v1362 = vunpack.c.l.b16 %v1289
        %v1363 = vunpack.c.l.b16 %v1290
        %v1364 = vunpack.c.l.b16 %v1291
        %v1365 = vunpack.c.l.b16 %v1292
        %v1366 = vunpack.c.l.b16 %v1293
        %v1367 = vunpack.c.l.b16 %v1294
        %v1368 = vunpack.c.l.b16 %v1295
        %v1369 = vunpack.c.l.b16 %v1296
        %v1370 = vunpack.c.l.b16 %v1297
        %v1371 = vunpack.c.l.b16 %v1298
        %v1372 = vunpack.c.l.b16 %v1299
        %v1373 = vunpack.c.l.b16 %v1300
        %v1374 = vunpack.c.l.b16 %v1301
        %v1375 = vunpack.c.l.b16 %v1302
        %v1376 = vunpack.c.l.b16 %v1303
        %v1377 = vunpack.c.l.b16 %v1304
        %v1378 = vunpack.c.l.b16 %v1305
        %v1379 = vunpack.c.l.b16 %v1306
        %v1380 = vunpack.c.l.b16 %v1307
        %v1381 = vunpack.c.l.b16 %v1308
        %v1382 = vpack.c.b16 %v1351, %v1350
        %v1383 = vpack.c.b16 %v1353, %v1352
        %v1384 = vpack.c.b16 %v1355, %v1354
        %v1385 = vpack.c.b16 %v1357, %v1356
        %v1386 = vpack.c.b16 %v1359, %v1358
        %v1387 = vpack.c.b16 %v1361, %v1360
        %v1388 = vpack.c.b16 %v1363, %v1362
        %v1389 = vpack.c.b16 %v1365, %v1364
        %v1390 = vpack.c.b16 %v1367, %v1366
        %v1391 = vpack.c.b16 %v1369, %v1368
        %v1392 = vpack.c.b16 %v1371, %v1370
        %v1393 = vpack.c.b16 %v1373, %v1372
        %v1394 = vpack.c.b16 %v1375, %v1374
        %v1395 = vpack.c.b16 %v1377, %v1376
        %v1396 = vpack.c.b16 %v1379, %v1378
        %v1397 = vpack.c.b16 %v1381, %v1380
        %v1406 = vunpack.c.l.b16 %v1310
        %v1407 = vunpack.c.l.b16 %v1311
        %v1408 = vunpack.c.l.b16 %v1312
        %v1409 = vunpack.c.l.b16 %v1313
        %v1410 = vunpack.c.l.b16 %v1314
        %v1411 = vunpack.c.l.b16 %v1315
        %v1412 = vunpack.c.l.b16 %v1316
        %v1413 = vunpack.c.l.b16 %v1317
        %v1414 = vpack.c.b16 %v1407, %v1406
        %v1415 = vpack.c.b16 %v1409, %v1408
        %v1416 = vpack.c.b16 %v1411, %v1410
        %v1417 = vpack.c.b16 %v1413, %v1412
        %v1423 = vsel %vm692, %v1382, 0
        %v1426 = vsel %vm692, %v1383, 0
        %v1429 = vsel %vm692, %v1384, 0
        %v1432 = vsel %vm692, %v1385, 0
        %v1435 = vsel %vm692, %v1386, 0
        %v1438 = vsel %vm692, %v1387, 0
        %v1441 = vsel %vm692, %v1388, 0
        %v1444 = vsel %vm692, %v1389, 0
        %v1447 = vsel %vm692, %v1390, 0
        %v1450 = vsel %vm692, %v1391, 0
        %v1453 = vsel %vm692, %v1392, 0
        %v1456 = vsel %vm692, %v1393, 0
        %v1459 = vsel %vm692, %v1394, 0
        %v1462 = vsel %vm692, %v1395, 0
        %v1465 = vsel %vm692, %v1396, 0
        %v1468 = vsel %vm692, %v1397, 0
        %1470 = vmatprep.subr.bf16.mxu0 0
        %1471 = vmatpush1.bf16.msra.mxu0 %v1414
        %1472 = vmatprep.subr.bf16.mxu0 0
        %1473 = vmatpush1.bf16.msra.mxu0 %v1415
        %1474 = vmatprep.subr.bf16.mxu0 0
        %1475 = vmatpush1.bf16.msra.mxu0 %v1416
        %1476 = vmatprep.subr.bf16.mxu0 0
        %1477 = vmatpush1.bf16.msra.mxu0 %v1417
        %1478 = vmatprep.subr.bf16.mxu0 0
        %1479 = vmatpush1.bf16.msra.mxu0 0
        %1480 = vmatprep.subr.bf16.mxu0 0
        %1481 = vmatpush1.bf16.msra.mxu0 0
        %1482 = vmatprep.subr.bf16.mxu0 0
        %1483 = vmatpush1.bf16.msra.mxu0 0
        %1484 = vmatprep.subr.bf16.mxu0 0
        %1485 = vmatpush1.bf16.msra.mxu0 0
        %1486 = vmatprep.subr.bf16.mxu0 0
        %1487 = vmatpush1.bf16.msra.mxu0 0
        %1488 = vmatprep.subr.bf16.mxu0 0
        %1489 = vmatpush1.bf16.msra.mxu0 0
        %1490 = vmatprep.subr.bf16.mxu0 0
        %1491 = vmatpush1.bf16.msra.mxu0 0
        %1492 = vmatprep.subr.bf16.mxu0 0
        %1493 = vmatpush1.bf16.msra.mxu0 0
        %1494 = vmatprep.subr.bf16.mxu0 0
        %1495 = vmatpush1.bf16.msra.mxu0 0
        %1496 = vmatprep.subr.bf16.mxu0 0
        %1497 = vmatpush1.bf16.msra.mxu0 0
        %1498 = vmatprep.subr.bf16.mxu0 0
        %1499 = vmatpush1.bf16.msra.mxu0 0
        %1500 = vmatprep.subr.bf16.mxu0 0
        %1501 = vmatpush1.bf16.msra.mxu0 0
        %1502 = vmatprep.mubr.bf16.mxu0 0
        %1503 = vmatmul.mubr.bf16.gmra.mrb[0].mxu0 %v1423
        %v1504 = vpop.f32.mrb[0].mxu0
        %v1505 = vadd.f32 0.0, %v1504
        %v1506 = vpop.f32.mrb[0].mxu0
        %v1507 = vpop.f32.mrb[0].mxu0
        %v1508 = vadd.f32 0.0, %v1507
        %v1509 = vpop.f32.mrb[0].mxu0
        %1510 = vmatprep.mubr.bf16.mxu0 0
        %1511 = vmatmul.mubr.bf16.gmra.mrb[0].mxu0 %v1426
        %v1512 = vpop.f32.mrb[0].mxu0
        %v1513 = vadd.f32 0.0, %v1512
        %v1514 = vpop.f32.mrb[0].mxu0
        %v1515 = vpop.f32.mrb[0].mxu0
        %v1516 = vadd.f32 0.0, %v1515
        %v1517 = vpop.f32.mrb[0].mxu0
        %1518 = vmatprep.mubr.bf16.mxu0 0
        %1519 = vmatmul.mubr.bf16.gmra.mrb[0].mxu0 %v1429
        %v1520 = vpop.f32.mrb[0].mxu0
        %v1521 = vadd.f32 0.0, %v1520
        %v1522 = vpop.f32.mrb[0].mxu0
        %v1523 = vpop.f32.mrb[0].mxu0
        %v1524 = vadd.f32 0.0, %v1523
        %v1525 = vpop.f32.mrb[0].mxu0
        %1526 = vmatprep.mubr.bf16.mxu0 0
        %1527 = vmatmul.mubr.bf16.gmra.mrb[0].mxu0 %v1432
        %v1528 = vpop.f32.mrb[0].mxu0
        %v1529 = vadd.f32 0.0, %v1528
        %v1530 = vpop.f32.mrb[0].mxu0
        %v1531 = vpop.f32.mrb[0].mxu0
        %v1532 = vadd.f32 0.0, %v1531
        %v1533 = vpop.f32.mrb[0].mxu0
        %1534 = vmatprep.mubr.bf16.mxu0 0
        %1535 = vmatmul.mubr.bf16.gmra.mrb[0].mxu0 %v1435
        %v1536 = vpop.f32.mrb[0].mxu0
        %v1537 = vadd.f32 0.0, %v1536
        %v1538 = vpop.f32.mrb[0].mxu0
        %v1539 = vpop.f32.mrb[0].mxu0
        %v1540 = vadd.f32 0.0, %v1539
        %v1541 = vpop.f32.mrb[0].mxu0
        %1542 = vmatprep.mubr.bf16.mxu0 0
        %1543 = vmatmul.mubr.bf16.gmra.mrb[0].mxu0 %v1438
        %v1544 = vpop.f32.mrb[0].mxu0
        %v1545 = vadd.f32 0.0, %v1544
        %v1546 = vpop.f32.mrb[0].mxu0
        %v1547 = vpop.f32.mrb[0].mxu0
        %v1548 = vadd.f32 0.0, %v1547
        %v1549 = vpop.f32.mrb[0].mxu0
        %1550 = vmatprep.mubr.bf16.mxu0 0
        %1551 = vmatmul.mubr.bf16.gmra.mrb[0].mxu0 %v1441
        %v1552 = vpop.f32.mrb[0].mxu0
        %v1553 = vadd.f32 0.0, %v1552
        %v1554 = vpop.f32.mrb[0].mxu0
        %v1555 = vpop.f32.mrb[0].mxu0
        %v1556 = vadd.f32 0.0, %v1555
        %v1557 = vpop.f32.mrb[0].mxu0
        %1558 = vmatprep.mubr.bf16.mxu0 0
        %1559 = vmatmul.mubr.bf16.gmra.mrb[0].mxu0 %v1444
        %v1560 = vpop.f32.mrb[0].mxu0
        %v1561 = vadd.f32 0.0, %v1560
        %v1562 = vpop.f32.mrb[0].mxu0
        %v1563 = vpop.f32.mrb[0].mxu0
        %v1564 = vadd.f32 0.0, %v1563
        %v1565 = vpop.f32.mrb[0].mxu0
        %1566 = vmatprep.mubr.bf16.mxu0 0
        %1567 = vmatmul.mubr.bf16.gmra.mrb[0].mxu0 %v1447
        %v1568 = vpop.f32.mrb[0].mxu0
        %v1569 = vadd.f32 0.0, %v1568
        %v1570 = vpop.f32.mrb[0].mxu0
        %v1571 = vpop.f32.mrb[0].mxu0
        %v1572 = vadd.f32 0.0, %v1571
        %v1573 = vpop.f32.mrb[0].mxu0
        %1574 = vmatprep.mubr.bf16.mxu0 0
        %1575 = vmatmul.mubr.bf16.gmra.mrb[0].mxu0 %v1450
        %v1576 = vpop.f32.mrb[0].mxu0
        %v1577 = vadd.f32 0.0, %v1576
        %v1578 = vpop.f32.mrb[0].mxu0
        %v1579 = vpop.f32.mrb[0].mxu0
        %v1580 = vadd.f32 0.0, %v1579
        %v1581 = vpop.f32.mrb[0].mxu0
        %1582 = vmatprep.mubr.bf16.mxu0 0
        %1583 = vmatmul.mubr.bf16.gmra.mrb[0].mxu0 %v1453
        %v1584 = vpop.f32.mrb[0].mxu0
        %v1585 = vadd.f32 0.0, %v1584
        %v1586 = vpop.f32.mrb[0].mxu0
        %v1587 = vpop.f32.mrb[0].mxu0
        %v1588 = vadd.f32 0.0, %v1587
        %v1589 = vpop.f32.mrb[0].mxu0
        %1590 = vmatprep.mubr.bf16.mxu0 0
        %1591 = vmatmul.mubr.bf16.gmra.mrb[0].mxu0 %v1456
        %v1592 = vpop.f32.mrb[0].mxu0
        %v1593 = vadd.f32 0.0, %v1592
        %v1594 = vpop.f32.mrb[0].mxu0
        %v1595 = vpop.f32.mrb[0].mxu0
        %v1596 = vadd.f32 0.0, %v1595
        %v1597 = vpop.f32.mrb[0].mxu0
        %1598 = vmatprep.mubr.bf16.mxu0 0
        %1599 = vmatmul.mubr.bf16.gmra.mrb[0].mxu0 %v1459
        %v1600 = vpop.f32.mrb[0].mxu0
        %v1601 = vadd.f32 0.0, %v1600
        %v1602 = vpop.f32.mrb[0].mxu0
        %v1603 = vpop.f32.mrb[0].mxu0
        %v1604 = vadd.f32 0.0, %v1603
        %v1605 = vpop.f32.mrb[0].mxu0
        %1606 = vmatprep.mubr.bf16.mxu0 0
        %1607 = vmatmul.mubr.bf16.gmra.mrb[0].mxu0 %v1462
        %v1608 = vpop.f32.mrb[0].mxu0
        %v1609 = vadd.f32 0.0, %v1608
        %v1610 = vpop.f32.mrb[0].mxu0
        %v1611 = vpop.f32.mrb[0].mxu0
        %v1612 = vadd.f32 0.0, %v1611
        %v1613 = vpop.f32.mrb[0].mxu0
        %1614 = vmatprep.mubr.bf16.mxu0 0
        %1615 = vmatmul.mubr.bf16.gmra.mrb[0].mxu0 %v1465
        %v1616 = vpop.f32.mrb[0].mxu0
        %v1617 = vadd.f32 0.0, %v1616
        %v1618 = vpop.f32.mrb[0].mxu0
        %v1619 = vpop.f32.mrb[0].mxu0
        %v1620 = vadd.f32 0.0, %v1619
        %v1621 = vpop.f32.mrb[0].mxu0
        %1622 = vmatprep.mubr.bf16.mxu0 0
        %1623 = vmatmul.mubr.bf16.gmra.mrb[0].mxu0 %v1468
        %v1624 = vpop.f32.mrb[0].mxu0
        %v1625 = vadd.f32 0.0, %v1624
        %v1626 = vpop.f32.mrb[0].mxu0
        %v1627 = vpop.f32.mrb[0].mxu0
        %v1628 = vadd.f32 0.0, %v1627
        %v1629 = vpop.f32.mrb[0].mxu0
        %1630 = vdwg.mxu0
        %v1663 = vunpack.c.l.b16 %v1173
        %v1664 = vunpack.c.l.b16 %v1174
        %v1665 = vunpack.c.l.b16 %v1175
        %v1666 = vunpack.c.l.b16 %v1176
        %v1667 = vunpack.c.l.b16 %v1177
        %v1668 = vunpack.c.l.b16 %v1178
        %v1669 = vunpack.c.l.b16 %v1179
        %v1670 = vunpack.c.l.b16 %v1180
        %v1671 = vunpack.c.l.b16 %v1181
        %v1672 = vunpack.c.l.b16 %v1182
        %v1673 = vunpack.c.l.b16 %v1183
        %v1674 = vunpack.c.l.b16 %v1184
        %v1675 = vunpack.c.l.b16 %v1185
        %v1676 = vunpack.c.l.b16 %v1186
        %v1677 = vunpack.c.l.b16 %v1187
        %v1678 = vunpack.c.l.b16 %v1188
        %v1679 = vunpack.c.l.b16 %v1189
        %v1680 = vunpack.c.l.b16 %v1190
        %v1681 = vunpack.c.l.b16 %v1191
        %v1682 = vunpack.c.l.b16 %v1192
        %v1683 = vunpack.c.l.b16 %v1193
        %v1684 = vunpack.c.l.b16 %v1194
        %v1685 = vunpack.c.l.b16 %v1195
        %v1686 = vunpack.c.l.b16 %v1196
        %v1687 = vunpack.c.l.b16 %v1197
        %v1688 = vunpack.c.l.b16 %v1198
        %v1689 = vunpack.c.l.b16 %v1199
        %v1690 = vunpack.c.l.b16 %v1200
        %v1691 = vunpack.c.l.b16 %v1201
        %v1692 = vunpack.c.l.b16 %v1202
        %v1693 = vunpack.c.l.b16 %v1203
        %v1694 = vunpack.c.l.b16 %v1204
        %v1695 = vpack.c.b16 %v1664, %v1663
        %v1696 = vpack.c.b16 %v1666, %v1665
        %v1697 = vpack.c.b16 %v1668, %v1667
        %v1698 = vpack.c.b16 %v1670, %v1669
        %v1699 = vpack.c.b16 %v1672, %v1671
        %v1700 = vpack.c.b16 %v1674, %v1673
        %v1701 = vpack.c.b16 %v1676, %v1675
        %v1702 = vpack.c.b16 %v1678, %v1677
        %v1703 = vpack.c.b16 %v1680, %v1679
        %v1704 = vpack.c.b16 %v1682, %v1681
        %v1705 = vpack.c.b16 %v1684, %v1683
        %v1706 = vpack.c.b16 %v1686, %v1685
        %v1707 = vpack.c.b16 %v1688, %v1687
        %v1708 = vpack.c.b16 %v1690, %v1689
        %v1709 = vpack.c.b16 %v1692, %v1691
        %v1710 = vpack.c.b16 %v1694, %v1693
        %v1719 = vunpack.c.l.b16 %v1205
        %v1720 = vunpack.c.l.b16 %v1206
        %v1721 = vunpack.c.l.b16 %v1207
        %v1722 = vunpack.c.l.b16 %v1208
        %v1723 = vunpack.c.l.b16 %v1209
        %v1724 = vunpack.c.l.b16 %v1210
        %v1725 = vunpack.c.l.b16 %v1211
        %v1726 = vunpack.c.l.b16 %v1212
        %v1727 = vpack.c.b16 %v1720, %v1719
        %v1728 = vpack.c.b16 %v1722, %v1721
        %v1729 = vpack.c.b16 %v1724, %v1723
        %v1730 = vpack.c.b16 %v1726, %v1725
        %v1736 = vsel %vm692, %v1695, 0
        %v1739 = vsel %vm692, %v1696, 0
        %v1742 = vsel %vm692, %v1697, 0
        %v1745 = vsel %vm692, %v1698, 0
        %v1748 = vsel %vm692, %v1699, 0
        %v1751 = vsel %vm692, %v1700, 0
        %v1754 = vsel %vm692, %v1701, 0
        %v1757 = vsel %vm692, %v1702, 0
        %v1760 = vsel %vm692, %v1703, 0
        %v1763 = vsel %vm692, %v1704, 0
        %v1766 = vsel %vm692, %v1705, 0
        %v1769 = vsel %vm692, %v1706, 0
        %v1772 = vsel %vm692, %v1707, 0
        %v1775 = vsel %vm692, %v1708, 0
        %v1778 = vsel %vm692, %v1709, 0
        %v1781 = vsel %vm692, %v1710, 0
        %1783 = vmatprep.subr.bf16.mxu0 0
        %1784 = vmatpush1.bf16.msra.mxu0 %v1727
        %1785 = vmatprep.subr.bf16.mxu0 0
        %1786 = vmatpush1.bf16.msra.mxu0 %v1728
        %1787 = vmatprep.subr.bf16.mxu0 0
        %1788 = vmatpush1.bf16.msra.mxu0 %v1729
        %1789 = vmatprep.subr.bf16.mxu0 0
        %1790 = vmatpush1.bf16.msra.mxu0 %v1730
        %1791 = vmatprep.subr.bf16.mxu0 0
        %1792 = vmatpush1.bf16.msra.mxu0 0
        %1793 = vmatprep.subr.bf16.mxu0 0
        %1794 = vmatpush1.bf16.msra.mxu0 0
        %1795 = vmatprep.subr.bf16.mxu0 0
        %1796 = vmatpush1.bf16.msra.mxu0 0
        %1797 = vmatprep.subr.bf16.mxu0 0
        %1798 = vmatpush1.bf16.msra.mxu0 0
        %1799 = vmatprep.subr.bf16.mxu0 0
        %1800 = vmatpush1.bf16.msra.mxu0 0
        %1801 = vmatprep.subr.bf16.mxu0 0
        %1802 = vmatpush1.bf16.msra.mxu0 0
        %1803 = vmatprep.subr.bf16.mxu0 0
        %1804 = vmatpush1.bf16.msra.mxu0 0
        %1805 = vmatprep.subr.bf16.mxu0 0
        %1806 = vmatpush1.bf16.msra.mxu0 0
        %1807 = vmatprep.subr.bf16.mxu0 0
        %1808 = vmatpush1.bf16.msra.mxu0 0
        %1809 = vmatprep.subr.bf16.mxu0 0
        %1810 = vmatpush1.bf16.msra.mxu0 0
        %1811 = vmatprep.subr.bf16.mxu0 0
        %1812 = vmatpush1.bf16.msra.mxu0 0
        %1813 = vmatprep.subr.bf16.mxu0 0
        %1814 = vmatpush1.bf16.msra.mxu0 0
        %1815 = vmatprep.mubr.bf16.mxu0 0
        %1816 = vmatmul.mubr.bf16.gmra.mrb[0].mxu0 %v1736
        %v1817 = vpop.f32.mrb[0].mxu0
        %v1818 = vadd.f32 %v1505, %v1817
        %v1819 = vpop.f32.mrb[0].mxu0
        %v1820 = vpop.f32.mrb[0].mxu0
        %v1821 = vadd.f32 %v1508, %v1820
        %v1822 = vpop.f32.mrb[0].mxu0
        %1823 = vmatprep.mubr.bf16.mxu0 0
        %1824 = vmatmul.mubr.bf16.gmra.mrb[0].mxu0 %v1739
        %v1825 = vpop.f32.mrb[0].mxu0
        %v1826 = vadd.f32 %v1513, %v1825
        %v1827 = vpop.f32.mrb[0].mxu0
        %v1828 = vpop.f32.mrb[0].mxu0
        %v1829 = vadd.f32 %v1516, %v1828
        %v1830 = vpop.f32.mrb[0].mxu0
        %1831 = vmatprep.mubr.bf16.mxu0 0
        %1832 = vmatmul.mubr.bf16.gmra.mrb[0].mxu0 %v1742
        %v1833 = vpop.f32.mrb[0].mxu0
        %v1834 = vadd.f32 %v1521, %v1833
        %v1835 = vpop.f32.mrb[0].mxu0
        %v1836 = vpop.f32.mrb[0].mxu0
        %v1837 = vadd.f32 %v1524, %v1836
        %v1838 = vpop.f32.mrb[0].mxu0
        %1839 = vmatprep.mubr.bf16.mxu0 0
        %1840 = vmatmul.mubr.bf16.gmra.mrb[0].mxu0 %v1745
        %v1841 = vpop.f32.mrb[0].mxu0
        %v1842 = vadd.f32 %v1529, %v1841
        %v1843 = vpop.f32.mrb[0].mxu0
        %v1844 = vpop.f32.mrb[0].mxu0
        %v1845 = vadd.f32 %v1532, %v1844
        %v1846 = vpop.f32.mrb[0].mxu0
        %1847 = vmatprep.mubr.bf16.mxu0 0
        %1848 = vmatmul.mubr.bf16.gmra.mrb[0].mxu0 %v1748
        %v1849 = vpop.f32.mrb[0].mxu0
        %v1850 = vadd.f32 %v1537, %v1849
        %v1851 = vpop.f32.mrb[0].mxu0
        %v1852 = vpop.f32.mrb[0].mxu0
        %v1853 = vadd.f32 %v1540, %v1852
        %v1854 = vpop.f32.mrb[0].mxu0
        %1855 = vmatprep.mubr.bf16.mxu0 0
        %1856 = vmatmul.mubr.bf16.gmra.mrb[0].mxu0 %v1751
        %v1857 = vpop.f32.mrb[0].mxu0
        %v1858 = vadd.f32 %v1545, %v1857
        %v1859 = vpop.f32.mrb[0].mxu0
        %v1860 = vpop.f32.mrb[0].mxu0
        %v1861 = vadd.f32 %v1548, %v1860
        %v1862 = vpop.f32.mrb[0].mxu0
        %1863 = vmatprep.mubr.bf16.mxu0 0
        %1864 = vmatmul.mubr.bf16.gmra.mrb[0].mxu0 %v1754
        %v1865 = vpop.f32.mrb[0].mxu0
        %v1866 = vadd.f32 %v1553, %v1865
        %v1867 = vpop.f32.mrb[0].mxu0
        %v1868 = vpop.f32.mrb[0].mxu0
        %v1869 = vadd.f32 %v1556, %v1868
        %v1870 = vpop.f32.mrb[0].mxu0
        %1871 = vmatprep.mubr.bf16.mxu0 0
        %1872 = vmatmul.mubr.bf16.gmra.mrb[0].mxu0 %v1757
        %v1873 = vpop.f32.mrb[0].mxu0
        %v1874 = vadd.f32 %v1561, %v1873
        %v1875 = vpop.f32.mrb[0].mxu0
        %v1876 = vpop.f32.mrb[0].mxu0
        %v1877 = vadd.f32 %v1564, %v1876
        %v1878 = vpop.f32.mrb[0].mxu0
        %1879 = vmatprep.mubr.bf16.mxu0 0
        %1880 = vmatmul.mubr.bf16.gmra.mrb[0].mxu0 %v1760
        %v1881 = vpop.f32.mrb[0].mxu0
        %v1882 = vadd.f32 %v1569, %v1881
        %v1883 = vpop.f32.mrb[0].mxu0
        %v1884 = vpop.f32.mrb[0].mxu0
        %v1885 = vadd.f32 %v1572, %v1884
        %v1886 = vpop.f32.mrb[0].mxu0
        %1887 = vmatprep.mubr.bf16.mxu0 0
        %1888 = vmatmul.mubr.bf16.gmra.mrb[0].mxu0 %v1763
        %v1889 = vpop.f32.mrb[0].mxu0
        %v1890 = vadd.f32 %v1577, %v1889
        %v1891 = vpop.f32.mrb[0].mxu0
        %v1892 = vpop.f32.mrb[0].mxu0
        %v1893 = vadd.f32 %v1580, %v1892
        %v1894 = vpop.f32.mrb[0].mxu0
        %1895 = vmatprep.mubr.bf16.mxu0 0
        %1896 = vmatmul.mubr.bf16.gmra.mrb[0].mxu0 %v1766
        %v1897 = vpop.f32.mrb[0].mxu0
        %v1898 = vadd.f32 %v1585, %v1897
        %v1899 = vpop.f32.mrb[0].mxu0
        %v1900 = vpop.f32.mrb[0].mxu0
        %v1901 = vadd.f32 %v1588, %v1900
        %v1902 = vpop.f32.mrb[0].mxu0
        %1903 = vmatprep.mubr.bf16.mxu0 0
        %1904 = vmatmul.mubr.bf16.gmra.mrb[0].mxu0 %v1769
        %v1905 = vpop.f32.mrb[0].mxu0
        %v1906 = vadd.f32 %v1593, %v1905
        %v1907 = vpop.f32.mrb[0].mxu0
        %v1908 = vpop.f32.mrb[0].mxu0
        %v1909 = vadd.f32 %v1596, %v1908
        %v1910 = vpop.f32.mrb[0].mxu0
        %1911 = vmatprep.mubr.bf16.mxu0 0
        %1912 = vmatmul.mubr.bf16.gmra.mrb[0].mxu0 %v1772
        %v1913 = vpop.f32.mrb[0].mxu0
        %v1914 = vadd.f32 %v1601, %v1913
        %v1915 = vpop.f32.mrb[0].mxu0
        %v1916 = vpop.f32.mrb[0].mxu0
        %v1917 = vadd.f32 %v1604, %v1916
        %v1918 = vpop.f32.mrb[0].mxu0
        %1919 = vmatprep.mubr.bf16.mxu0 0
        %1920 = vmatmul.mubr.bf16.gmra.mrb[0].mxu0 %v1775
        %v1921 = vpop.f32.mrb[0].mxu0
        %v1922 = vadd.f32 %v1609, %v1921
        %v1923 = vpop.f32.mrb[0].mxu0
        %v1924 = vpop.f32.mrb[0].mxu0
        %v1925 = vadd.f32 %v1612, %v1924
        %v1926 = vpop.f32.mrb[0].mxu0
        %1927 = vmatprep.mubr.bf16.mxu0 0
        %1928 = vmatmul.mubr.bf16.gmra.mrb[0].mxu0 %v1778
        %v1929 = vpop.f32.mrb[0].mxu0
        %v1930 = vadd.f32 %v1617, %v1929
        %v1931 = vpop.f32.mrb[0].mxu0
        %v1932 = vpop.f32.mrb[0].mxu0
        %v1933 = vadd.f32 %v1620, %v1932
        %v1934 = vpop.f32.mrb[0].mxu0
        %1935 = vmatprep.mubr.bf16.mxu0 0
        %1936 = vmatmul.mubr.bf16.gmra.mrb[0].mxu0 %v1781
        %v1937 = vpop.f32.mrb[0].mxu0
        %v1938 = vadd.f32 %v1625, %v1937
        %v1939 = vpop.f32.mrb[0].mxu0
        %v1940 = vpop.f32.mrb[0].mxu0
        %v1941 = vadd.f32 %v1628, %v1940
        %v1942 = vpop.f32.mrb[0].mxu0
        %1943 = vdwg.mxu0
        %v1944 = vsub.f32 %v435, %v789
        %v1945 = vsub.f32 %v436, %v790
        %v1946 = vsub.f32 %v437, %v791
        %v1947 = vsub.f32 %v438, %v792
        %v1948 = vsub.f32 %v439, %v793
        %v1949 = vsub.f32 %v440, %v794
        %v1950 = vsub.f32 %v441, %v795
        %v1951 = vsub.f32 %v442, %v796
        %v1952 = vsub.f32 %v443, %v797
        %v1953 = vsub.f32 %v444, %v798
        %v1954 = vsub.f32 %v445, %v799
        %v1955 = vsub.f32 %v446, %v800
        %v1956 = vsub.f32 %v447, %v801
        %v1957 = vsub.f32 %v448, %v802
        %v1958 = vsub.f32 %v449, %v803
        %v1959 = vsub.f32 %v450, %v804
        %v1960 = vsub.f32 %v451, %v805
        %v1961 = vsub.f32 %v452, %v806
        %v1962 = vsub.f32 %v453, %v807
        %v1963 = vsub.f32 %v454, %v808
        %v1964 = vsub.f32 %v455, %v809
        %v1965 = vsub.f32 %v456, %v810
        %v1966 = vsub.f32 %v457, %v811
        %v1967 = vsub.f32 %v458, %v812
        %v1968 = vsub.f32 %v459, %v813
        %v1969 = vsub.f32 %v460, %v814
        %v1970 = vsub.f32 %v461, %v815
        %v1971 = vsub.f32 %v462, %v816
        %v1972 = vsub.f32 %v463, %v817
        %v1973 = vsub.f32 %v464, %v818
        %v1974 = vsub.f32 %v465, %v819
        %v1975 = vsub.f32 %v466, %v820
        %v1976 = vmul.f32 %v1944, %v1077
        %v1977 = vmul.f32 %v1945, %v1078
        %v1978 = vmul.f32 %v1946, %v1079
        %v1979 = vmul.f32 %v1947, %v1080
        %v1980 = vmul.f32 %v1948, %v1081
        %v1981 = vmul.f32 %v1949, %v1082
        %v1982 = vmul.f32 %v1950, %v1083
        %v1983 = vmul.f32 %v1951, %v1084
        %v1984 = vmul.f32 %v1952, %v1085
        %v1985 = vmul.f32 %v1953, %v1086
        %v1986 = vmul.f32 %v1954, %v1087
        %v1987 = vmul.f32 %v1955, %v1088
        %v1988 = vmul.f32 %v1956, %v1089
        %v1989 = vmul.f32 %v1957, %v1090
        %v1990 = vmul.f32 %v1958, %v1091
        %v1991 = vmul.f32 %v1959, %v1092
        %v1992 = vmul.f32 %v1960, %v1093
        %v1993 = vmul.f32 %v1961, %v1094
        %v1994 = vmul.f32 %v1962, %v1095
        %v1995 = vmul.f32 %v1963, %v1096
        %v1996 = vmul.f32 %v1964, %v1097
        %v1997 = vmul.f32 %v1965, %v1098
        %v1998 = vmul.f32 %v1966, %v1099
        %v1999 = vmul.f32 %v1967, %v1100
        %v2000 = vmul.f32 %v1968, %v1101
        %v2001 = vmul.f32 %v1969, %v1102
        %v2002 = vmul.f32 %v1970, %v1103
        %v2003 = vmul.f32 %v1971, %v1104
        %v2004 = vmul.f32 %v1972, %v1105
        %v2005 = vmul.f32 %v1973, %v1106
        %v2006 = vmul.f32 %v1974, %v1107
        %v2007 = vmul.f32 %v1975, %v1108
        %v2008 = vpack.c.bf16 %v1976, %v1976
        %v2009 = vpack.c.bf16 %v1977, %v1977
        %v2010 = vpack.c.bf16 %v1978, %v1978
        %v2011 = vpack.c.bf16 %v1979, %v1979
        %v2012 = vpack.c.bf16 %v1980, %v1980
        %v2013 = vpack.c.bf16 %v1981, %v1981
        %v2014 = vpack.c.bf16 %v1982, %v1982
        %v2015 = vpack.c.bf16 %v1983, %v1983
        %v2016 = vpack.c.bf16 %v1984, %v1984
        %v2017 = vpack.c.bf16 %v1985, %v1985
        %v2018 = vpack.c.bf16 %v1986, %v1986
        %v2019 = vpack.c.bf16 %v1987, %v1987
        %v2020 = vpack.c.bf16 %v1988, %v1988
        %v2021 = vpack.c.bf16 %v1989, %v1989
        %v2022 = vpack.c.bf16 %v1990, %v1990
        %v2023 = vpack.c.bf16 %v1991, %v1991
        %v2024 = vpack.c.bf16 %v1992, %v1992
        %v2025 = vpack.c.bf16 %v1993, %v1993
        %v2026 = vpack.c.bf16 %v1994, %v1994
        %v2027 = vpack.c.bf16 %v1995, %v1995
        %v2028 = vpack.c.bf16 %v1996, %v1996
        %v2029 = vpack.c.bf16 %v1997, %v1997
        %v2030 = vpack.c.bf16 %v1998, %v1998
        %v2031 = vpack.c.bf16 %v1999, %v1999
        %v2032 = vpack.c.bf16 %v2000, %v2000
        %v2033 = vpack.c.bf16 %v2001, %v2001
        %v2034 = vpack.c.bf16 %v2002, %v2002
        %v2035 = vpack.c.bf16 %v2003, %v2003
        %v2036 = vpack.c.bf16 %v2004, %v2004
        %v2037 = vpack.c.bf16 %v2005, %v2005
        %v2038 = vpack.c.bf16 %v2006, %v2006
        %v2039 = vpack.c.bf16 %v2007, %v2007
        %s2040 = scalar_lea.vmem [#allocation5], 64
        %v2041 = vld [vmem:[%s2040] sm:$0xf]
        %v2042 = vld [vmem:[%s2040 + $0x4] sm:$0xf]
        %v2043 = vld [vmem:[%s2040 + $0x8] sm:$0xf]
        %v2044 = vld [vmem:[%s2040 + $0xc] sm:$0xf]
        %v2045 = vld [vmem:[%s2040 + $0x10] sm:$0xf]
        %v2046 = vld [vmem:[%s2040 + $0x14] sm:$0xf]
        %v2047 = vld [vmem:[%s2040 + $0x18] sm:$0xf]
        %v2048 = vld [vmem:[%s2040 + $0x1c] sm:$0xf]
        %v2081 = vunpack.c.l.b16 %v2008
        %v2082 = vunpack.c.l.b16 %v2009
        %v2083 = vunpack.c.l.b16 %v2010
        %v2084 = vunpack.c.l.b16 %v2011
        %v2085 = vunpack.c.l.b16 %v2012
        %v2086 = vunpack.c.l.b16 %v2013
        %v2087 = vunpack.c.l.b16 %v2014
        %v2088 = vunpack.c.l.b16 %v2015
        %v2089 = vunpack.c.l.b16 %v2016
        %v2090 = vunpack.c.l.b16 %v2017
        %v2091 = vunpack.c.l.b16 %v2018
        %v2092 = vunpack.c.l.b16 %v2019
        %v2093 = vunpack.c.l.b16 %v2020
        %v2094 = vunpack.c.l.b16 %v2021
        %v2095 = vunpack.c.l.b16 %v2022
        %v2096 = vunpack.c.l.b16 %v2023
        %v2097 = vunpack.c.l.b16 %v2024
        %v2098 = vunpack.c.l.b16 %v2025
        %v2099 = vunpack.c.l.b16 %v2026
        %v2100 = vunpack.c.l.b16 %v2027
        %v2101 = vunpack.c.l.b16 %v2028
        %v2102 = vunpack.c.l.b16 %v2029
        %v2103 = vunpack.c.l.b16 %v2030
        %v2104 = vunpack.c.l.b16 %v2031
        %v2105 = vunpack.c.l.b16 %v2032
        %v2106 = vunpack.c.l.b16 %v2033
        %v2107 = vunpack.c.l.b16 %v2034
        %v2108 = vunpack.c.l.b16 %v2035
        %v2109 = vunpack.c.l.b16 %v2036
        %v2110 = vunpack.c.l.b16 %v2037
        %v2111 = vunpack.c.l.b16 %v2038
        %v2112 = vunpack.c.l.b16 %v2039
        %v2113 = vpack.c.b16 %v2082, %v2081
        %v2114 = vpack.c.b16 %v2084, %v2083
        %v2115 = vpack.c.b16 %v2086, %v2085
        %v2116 = vpack.c.b16 %v2088, %v2087
        %v2117 = vpack.c.b16 %v2090, %v2089
        %v2118 = vpack.c.b16 %v2092, %v2091
        %v2119 = vpack.c.b16 %v2094, %v2093
        %v2120 = vpack.c.b16 %v2096, %v2095
        %v2121 = vpack.c.b16 %v2098, %v2097
        %v2122 = vpack.c.b16 %v2100, %v2099
        %v2123 = vpack.c.b16 %v2102, %v2101
        %v2124 = vpack.c.b16 %v2104, %v2103
        %v2125 = vpack.c.b16 %v2106, %v2105
        %v2126 = vpack.c.b16 %v2108, %v2107
        %v2127 = vpack.c.b16 %v2110, %v2109
        %v2128 = vpack.c.b16 %v2112, %v2111
        %v2137 = vunpack.c.l.b16 %v2041
        %v2138 = vunpack.c.l.b16 %v2042
        %v2139 = vunpack.c.l.b16 %v2043
        %v2140 = vunpack.c.l.b16 %v2044
        %v2141 = vunpack.c.l.b16 %v2045
        %v2142 = vunpack.c.l.b16 %v2046
        %v2143 = vunpack.c.l.b16 %v2047
        %v2144 = vunpack.c.l.b16 %v2048
        %v2145 = vpack.c.b16 %v2138, %v2137
        %v2146 = vpack.c.b16 %v2140, %v2139
        %v2147 = vpack.c.b16 %v2142, %v2141
        %v2148 = vpack.c.b16 %v2144, %v2143
        %v2154 = vsel %vm692, %v2113, 0
        %v2157 = vsel %vm692, %v2114, 0
        %v2160 = vsel %vm692, %v2115, 0
        %v2163 = vsel %vm692, %v2116, 0
        %v2166 = vsel %vm692, %v2117, 0
        %v2169 = vsel %vm692, %v2118, 0
        %v2172 = vsel %vm692, %v2119, 0
        %v2175 = vsel %vm692, %v2120, 0
        %v2178 = vsel %vm692, %v2121, 0
        %v2181 = vsel %vm692, %v2122, 0
        %v2184 = vsel %vm692, %v2123, 0
        %v2187 = vsel %vm692, %v2124, 0
        %v2190 = vsel %vm692, %v2125, 0
        %v2193 = vsel %vm692, %v2126, 0
        %v2196 = vsel %vm692, %v2127, 0
        %v2199 = vsel %vm692, %v2128, 0
        %2201 = vmatprep.subr.bf16.mxu0 0
        %2202 = vmatpush1.bf16.msra.mxu0 %v2145
        %2203 = vmatprep.subr.bf16.mxu0 0
        %2204 = vmatpush1.bf16.msra.mxu0 %v2146
        %2205 = vmatprep.subr.bf16.mxu0 0
        %2206 = vmatpush1.bf16.msra.mxu0 %v2147
        %2207 = vmatprep.subr.bf16.mxu0 0
        %2208 = vmatpush1.bf16.msra.mxu0 %v2148
        %2209 = vmatprep.subr.bf16.mxu0 0
        %2210 = vmatpush1.bf16.msra.mxu0 0
        %2211 = vmatprep.subr.bf16.mxu0 0
        %2212 = vmatpush1.bf16.msra.mxu0 0
        %2213 = vmatprep.subr.bf16.mxu0 0
        %2214 = vmatpush1.bf16.msra.mxu0 0
        %2215 = vmatprep.subr.bf16.mxu0 0
        %2216 = vmatpush1.bf16.msra.mxu0 0
        %2217 = vmatprep.subr.bf16.mxu0 0
        %2218 = vmatpush1.bf16.msra.mxu0 0
        %2219 = vmatprep.subr.bf16.mxu0 0
        %2220 = vmatpush1.bf16.msra.mxu0 0
        %2221 = vmatprep.subr.bf16.mxu0 0
        %2222 = vmatpush1.bf16.msra.mxu0 0
        %2223 = vmatprep.subr.bf16.mxu0 0
        %2224 = vmatpush1.bf16.msra.mxu0 0
        %2225 = vmatprep.subr.bf16.mxu0 0
        %2226 = vmatpush1.bf16.msra.mxu0 0
        %2227 = vmatprep.subr.bf16.mxu0 0
        %2228 = vmatpush1.bf16.msra.mxu0 0
        %2229 = vmatprep.subr.bf16.mxu0 0
        %2230 = vmatpush1.bf16.msra.mxu0 0
        %2231 = vmatprep.subr.bf16.mxu0 0
        %2232 = vmatpush1.bf16.msra.mxu0 0
        %2233 = vmatprep.mubr.bf16.mxu0 0
        %2234 = vmatmul.mubr.bf16.gmra.mrb[0].mxu0 %v2154
        %v2235 = vpop.f32.mrb[0].mxu0
        %v2236 = vadd.f32 0.0, %v2235
        %v2237 = vpop.f32.mrb[0].mxu0
        %v2238 = vpop.f32.mrb[0].mxu0
        %v2239 = vadd.f32 0.0, %v2238
        %v2240 = vpop.f32.mrb[0].mxu0
        %2241 = vmatprep.mubr.bf16.mxu0 0
        %2242 = vmatmul.mubr.bf16.gmra.mrb[0].mxu0 %v2157
        %v2243 = vpop.f32.mrb[0].mxu0
        %v2244 = vadd.f32 0.0, %v2243
        %v2245 = vpop.f32.mrb[0].mxu0
        %v2246 = vpop.f32.mrb[0].mxu0
        %v2247 = vadd.f32 0.0, %v2246
        %v2248 = vpop.f32.mrb[0].mxu0
        %2249 = vmatprep.mubr.bf16.mxu0 0
        %2250 = vmatmul.mubr.bf16.gmra.mrb[0].mxu0 %v2160
        %v2251 = vpop.f32.mrb[0].mxu0
        %v2252 = vadd.f32 0.0, %v2251
        %v2253 = vpop.f32.mrb[0].mxu0
        %v2254 = vpop.f32.mrb[0].mxu0
        %v2255 = vadd.f32 0.0, %v2254
        %v2256 = vpop.f32.mrb[0].mxu0
        %2257 = vmatprep.mubr.bf16.mxu0 0
        %2258 = vmatmul.mubr.bf16.gmra.mrb[0].mxu0 %v2163
        %v2259 = vpop.f32.mrb[0].mxu0
        %v2260 = vadd.f32 0.0, %v2259
        %v2261 = vpop.f32.mrb[0].mxu0
        %v2262 = vpop.f32.mrb[0].mxu0
        %v2263 = vadd.f32 0.0, %v2262
        %v2264 = vpop.f32.mrb[0].mxu0
        %2265 = vmatprep.mubr.bf16.mxu0 0
        %2266 = vmatmul.mubr.bf16.gmra.mrb[0].mxu0 %v2166
        %v2267 = vpop.f32.mrb[0].mxu0
        %v2268 = vadd.f32 0.0, %v2267
        %v2269 = vpop.f32.mrb[0].mxu0
        %v2270 = vpop.f32.mrb[0].mxu0
        %v2271 = vadd.f32 0.0, %v2270
        %v2272 = vpop.f32.mrb[0].mxu0
        %2273 = vmatprep.mubr.bf16.mxu0 0
        %2274 = vmatmul.mubr.bf16.gmra.mrb[0].mxu0 %v2169
        %v2275 = vpop.f32.mrb[0].mxu0
        %v2276 = vadd.f32 0.0, %v2275
        %v2277 = vpop.f32.mrb[0].mxu0
        %v2278 = vpop.f32.mrb[0].mxu0
        %v2279 = vadd.f32 0.0, %v2278
        %v2280 = vpop.f32.mrb[0].mxu0
        %2281 = vmatprep.mubr.bf16.mxu0 0
        %2282 = vmatmul.mubr.bf16.gmra.mrb[0].mxu0 %v2172
        %v2283 = vpop.f32.mrb[0].mxu0
        %v2284 = vadd.f32 0.0, %v2283
        %v2285 = vpop.f32.mrb[0].mxu0
        %v2286 = vpop.f32.mrb[0].mxu0
        %v2287 = vadd.f32 0.0, %v2286
        %v2288 = vpop.f32.mrb[0].mxu0
        %2289 = vmatprep.mubr.bf16.mxu0 0
        %2290 = vmatmul.mubr.bf16.gmra.mrb[0].mxu0 %v2175
        %v2291 = vpop.f32.mrb[0].mxu0
        %v2292 = vadd.f32 0.0, %v2291
        %v2293 = vpop.f32.mrb[0].mxu0
        %v2294 = vpop.f32.mrb[0].mxu0
        %v2295 = vadd.f32 0.0, %v2294
        %v2296 = vpop.f32.mrb[0].mxu0
        %2297 = vmatprep.mubr.bf16.mxu0 0
        %2298 = vmatmul.mubr.bf16.gmra.mrb[0].mxu0 %v2178
        %v2299 = vpop.f32.mrb[0].mxu0
        %v2300 = vadd.f32 0.0, %v2299
        %v2301 = vpop.f32.mrb[0].mxu0
        %v2302 = vpop.f32.mrb[0].mxu0
        %v2303 = vadd.f32 0.0, %v2302
        %v2304 = vpop.f32.mrb[0].mxu0
        %2305 = vmatprep.mubr.bf16.mxu0 0
        %2306 = vmatmul.mubr.bf16.gmra.mrb[0].mxu0 %v2181
        %v2307 = vpop.f32.mrb[0].mxu0
        %v2308 = vadd.f32 0.0, %v2307
        %v2309 = vpop.f32.mrb[0].mxu0
        %v2310 = vpop.f32.mrb[0].mxu0
        %v2311 = vadd.f32 0.0, %v2310
        %v2312 = vpop.f32.mrb[0].mxu0
        %2313 = vmatprep.mubr.bf16.mxu0 0
        %2314 = vmatmul.mubr.bf16.gmra.mrb[0].mxu0 %v2184
        %v2315 = vpop.f32.mrb[0].mxu0
        %v2316 = vadd.f32 0.0, %v2315
        %v2317 = vpop.f32.mrb[0].mxu0
        %v2318 = vpop.f32.mrb[0].mxu0
        %v2319 = vadd.f32 0.0, %v2318
        %v2320 = vpop.f32.mrb[0].mxu0
        %2321 = vmatprep.mubr.bf16.mxu0 0
        %2322 = vmatmul.mubr.bf16.gmra.mrb[0].mxu0 %v2187
        %v2323 = vpop.f32.mrb[0].mxu0
        %v2324 = vadd.f32 0.0, %v2323
        %v2325 = vpop.f32.mrb[0].mxu0
        %v2326 = vpop.f32.mrb[0].mxu0
        %v2327 = vadd.f32 0.0, %v2326
        %v2328 = vpop.f32.mrb[0].mxu0
        %2329 = vmatprep.mubr.bf16.mxu0 0
        %2330 = vmatmul.mubr.bf16.gmra.mrb[0].mxu0 %v2190
        %v2331 = vpop.f32.mrb[0].mxu0
        %v2332 = vadd.f32 0.0, %v2331
        %v2333 = vpop.f32.mrb[0].mxu0
        %v2334 = vpop.f32.mrb[0].mxu0
        %v2335 = vadd.f32 0.0, %v2334
        %v2336 = vpop.f32.mrb[0].mxu0
        %2337 = vmatprep.mubr.bf16.mxu0 0
        %2338 = vmatmul.mubr.bf16.gmra.mrb[0].mxu0 %v2193
        %v2339 = vpop.f32.mrb[0].mxu0
        %v2340 = vadd.f32 0.0, %v2339
        %v2341 = vpop.f32.mrb[0].mxu0
        %v2342 = vpop.f32.mrb[0].mxu0
        %v2343 = vadd.f32 0.0, %v2342
        %v2344 = vpop.f32.mrb[0].mxu0
        %2345 = vmatprep.mubr.bf16.mxu0 0
        %2346 = vmatmul.mubr.bf16.gmra.mrb[0].mxu0 %v2196
        %v2347 = vpop.f32.mrb[0].mxu0
        %v2348 = vadd.f32 0.0, %v2347
        %v2349 = vpop.f32.mrb[0].mxu0
        %v2350 = vpop.f32.mrb[0].mxu0
        %v2351 = vadd.f32 0.0, %v2350
        %v2352 = vpop.f32.mrb[0].mxu0
        %2353 = vmatprep.mubr.bf16.mxu0 0
        %2354 = vmatmul.mubr.bf16.gmra.mrb[0].mxu0 %v2199
        %v2355 = vpop.f32.mrb[0].mxu0
        %v2356 = vadd.f32 0.0, %v2355
        %v2357 = vpop.f32.mrb[0].mxu0
        %v2358 = vpop.f32.mrb[0].mxu0
        %v2359 = vadd.f32 0.0, %v2358
        %v2360 = vpop.f32.mrb[0].mxu0
        %2361 = vdwg.mxu0
        %v2362 = vadd.f32 %v1818, %v2236
        %v2363 = vadd.f32 %v1821, %v2239
        %v2364 = vadd.f32 %v1826, %v2244
        %v2365 = vadd.f32 %v1829, %v2247
        %v2366 = vadd.f32 %v1834, %v2252
        %v2367 = vadd.f32 %v1837, %v2255
        %v2368 = vadd.f32 %v1842, %v2260
        %v2369 = vadd.f32 %v1845, %v2263
        %v2370 = vadd.f32 %v1850, %v2268
        %v2371 = vadd.f32 %v1853, %v2271
        %v2372 = vadd.f32 %v1858, %v2276
        %v2373 = vadd.f32 %v1861, %v2279
        %v2374 = vadd.f32 %v1866, %v2284
        %v2375 = vadd.f32 %v1869, %v2287
        %v2376 = vadd.f32 %v1874, %v2292
        %v2377 = vadd.f32 %v1877, %v2295
        %v2378 = vadd.f32 %v1882, %v2300
        %v2379 = vadd.f32 %v1885, %v2303
        %v2380 = vadd.f32 %v1890, %v2308
        %v2381 = vadd.f32 %v1893, %v2311
        %v2382 = vadd.f32 %v1898, %v2316
        %v2383 = vadd.f32 %v1901, %v2319
        %v2384 = vadd.f32 %v1906, %v2324
        %v2385 = vadd.f32 %v1909, %v2327
        %v2386 = vadd.f32 %v1914, %v2332
        %v2387 = vadd.f32 %v1917, %v2335
        %v2388 = vadd.f32 %v1922, %v2340
        %v2389 = vadd.f32 %v1925, %v2343
        %v2390 = vadd.f32 %v1930, %v2348
        %v2391 = vadd.f32 %v1933, %v2351
        %v2392 = vadd.f32 %v1938, %v2356
        %v2393 = vadd.f32 %v1941, %v2359
        %v2394 = vsub.f32 %v564, %v789
        %v2395 = vsub.f32 %v565, %v790
        %v2396 = vsub.f32 %v566, %v791
        %v2397 = vsub.f32 %v567, %v792
        %v2398 = vsub.f32 %v568, %v793
        %v2399 = vsub.f32 %v569, %v794
        %v2400 = vsub.f32 %v570, %v795
        %v2401 = vsub.f32 %v571, %v796
        %v2402 = vsub.f32 %v572, %v797
        %v2403 = vsub.f32 %v573, %v798
        %v2404 = vsub.f32 %v574, %v799
        %v2405 = vsub.f32 %v575, %v800
        %v2406 = vsub.f32 %v576, %v801
        %v2407 = vsub.f32 %v577, %v802
        %v2408 = vsub.f32 %v578, %v803
        %v2409 = vsub.f32 %v579, %v804
        %v2410 = vsub.f32 %v580, %v805
        %v2411 = vsub.f32 %v581, %v806
        %v2412 = vsub.f32 %v582, %v807
        %v2413 = vsub.f32 %v583, %v808
        %v2414 = vsub.f32 %v584, %v809
        %v2415 = vsub.f32 %v585, %v810
        %v2416 = vsub.f32 %v586, %v811
        %v2417 = vsub.f32 %v587, %v812
        %v2418 = vsub.f32 %v588, %v813
        %v2419 = vsub.f32 %v589, %v814
        %v2420 = vsub.f32 %v590, %v815
        %v2421 = vsub.f32 %v591, %v816
        %v2422 = vsub.f32 %v592, %v817
        %v2423 = vsub.f32 %v593, %v818
        %v2424 = vsub.f32 %v594, %v819
        %v2425 = vsub.f32 %v595, %v820
        %v2426 = vmul.f32 %v2394, %v1077
        %v2427 = vmul.f32 %v2395, %v1078
        %v2428 = vmul.f32 %v2396, %v1079
        %v2429 = vmul.f32 %v2397, %v1080
        %v2430 = vmul.f32 %v2398, %v1081
        %v2431 = vmul.f32 %v2399, %v1082
        %v2432 = vmul.f32 %v2400, %v1083
        %v2433 = vmul.f32 %v2401, %v1084
        %v2434 = vmul.f32 %v2402, %v1085
        %v2435 = vmul.f32 %v2403, %v1086
        %v2436 = vmul.f32 %v2404, %v1087
        %v2437 = vmul.f32 %v2405, %v1088
        %v2438 = vmul.f32 %v2406, %v1089
        %v2439 = vmul.f32 %v2407, %v1090
        %v2440 = vmul.f32 %v2408, %v1091
        %v2441 = vmul.f32 %v2409, %v1092
        %v2442 = vmul.f32 %v2410, %v1093
        %v2443 = vmul.f32 %v2411, %v1094
        %v2444 = vmul.f32 %v2412, %v1095
        %v2445 = vmul.f32 %v2413, %v1096
        %v2446 = vmul.f32 %v2414, %v1097
        %v2447 = vmul.f32 %v2415, %v1098
        %v2448 = vmul.f32 %v2416, %v1099
        %v2449 = vmul.f32 %v2417, %v1100
        %v2450 = vmul.f32 %v2418, %v1101
        %v2451 = vmul.f32 %v2419, %v1102
        %v2452 = vmul.f32 %v2420, %v1103
        %v2453 = vmul.f32 %v2421, %v1104
        %v2454 = vmul.f32 %v2422, %v1105
        %v2455 = vmul.f32 %v2423, %v1106
        %v2456 = vmul.f32 %v2424, %v1107
        %v2457 = vmul.f32 %v2425, %v1108
        %v2458 = vpack.c.bf16 %v2426, %v2426
        %v2459 = vpack.c.bf16 %v2427, %v2427
        %v2460 = vpack.c.bf16 %v2428, %v2428
        %v2461 = vpack.c.bf16 %v2429, %v2429
        %v2462 = vpack.c.bf16 %v2430, %v2430
        %v2463 = vpack.c.bf16 %v2431, %v2431
        %v2464 = vpack.c.bf16 %v2432, %v2432
        %v2465 = vpack.c.bf16 %v2433, %v2433
        %v2466 = vpack.c.bf16 %v2434, %v2434
        %v2467 = vpack.c.bf16 %v2435, %v2435
        %v2468 = vpack.c.bf16 %v2436, %v2436
        %v2469 = vpack.c.bf16 %v2437, %v2437
        %v2470 = vpack.c.bf16 %v2438, %v2438
        %v2471 = vpack.c.bf16 %v2439, %v2439
        %v2472 = vpack.c.bf16 %v2440, %v2440
        %v2473 = vpack.c.bf16 %v2441, %v2441
        %v2474 = vpack.c.bf16 %v2442, %v2442
        %v2475 = vpack.c.bf16 %v2443, %v2443
        %v2476 = vpack.c.bf16 %v2444, %v2444
        %v2477 = vpack.c.bf16 %v2445, %v2445
        %v2478 = vpack.c.bf16 %v2446, %v2446
        %v2479 = vpack.c.bf16 %v2447, %v2447
        %v2480 = vpack.c.bf16 %v2448, %v2448
        %v2481 = vpack.c.bf16 %v2449, %v2449
        %v2482 = vpack.c.bf16 %v2450, %v2450
        %v2483 = vpack.c.bf16 %v2451, %v2451
        %v2484 = vpack.c.bf16 %v2452, %v2452
        %v2485 = vpack.c.bf16 %v2453, %v2453
        %v2486 = vpack.c.bf16 %v2454, %v2454
        %v2487 = vpack.c.bf16 %v2455, %v2455
        %v2488 = vpack.c.bf16 %v2456, %v2456
        %v2489 = vpack.c.bf16 %v2457, %v2457
        %s2490 = scalar_lea.vmem [#allocation5], 96
        %v2491 = vld [vmem:[%s2490] sm:$0xf]
        %v2492 = vld [vmem:[%s2490 + $0x4] sm:$0xf]
        %v2493 = vld [vmem:[%s2490 + $0x8] sm:$0xf]
        %v2494 = vld [vmem:[%s2490 + $0xc] sm:$0xf]
        %v2495 = vld [vmem:[%s2490 + $0x10] sm:$0xf]
        %v2496 = vld [vmem:[%s2490 + $0x14] sm:$0xf]
        %v2497 = vld [vmem:[%s2490 + $0x18] sm:$0xf]
        %v2498 = vld [vmem:[%s2490 + $0x1c] sm:$0xf]
        %v2531 = vunpack.c.l.b16 %v2458
        %v2532 = vunpack.c.l.b16 %v2459
        %v2533 = vunpack.c.l.b16 %v2460
        %v2534 = vunpack.c.l.b16 %v2461
        %v2535 = vunpack.c.l.b16 %v2462
        %v2536 = vunpack.c.l.b16 %v2463
        %v2537 = vunpack.c.l.b16 %v2464
        %v2538 = vunpack.c.l.b16 %v2465
        %v2539 = vunpack.c.l.b16 %v2466
        %v2540 = vunpack.c.l.b16 %v2467
        %v2541 = vunpack.c.l.b16 %v2468
        %v2542 = vunpack.c.l.b16 %v2469
        %v2543 = vunpack.c.l.b16 %v2470
        %v2544 = vunpack.c.l.b16 %v2471
        %v2545 = vunpack.c.l.b16 %v2472
        %v2546 = vunpack.c.l.b16 %v2473
        %v2547 = vunpack.c.l.b16 %v2474
        %v2548 = vunpack.c.l.b16 %v2475
        %v2549 = vunpack.c.l.b16 %v2476
        %v2550 = vunpack.c.l.b16 %v2477
        %v2551 = vunpack.c.l.b16 %v2478
        %v2552 = vunpack.c.l.b16 %v2479
        %v2553 = vunpack.c.l.b16 %v2480
        %v2554 = vunpack.c.l.b16 %v2481
        %v2555 = vunpack.c.l.b16 %v2482
        %v2556 = vunpack.c.l.b16 %v2483
        %v2557 = vunpack.c.l.b16 %v2484
        %v2558 = vunpack.c.l.b16 %v2485
        %v2559 = vunpack.c.l.b16 %v2486
        %v2560 = vunpack.c.l.b16 %v2487
        %v2561 = vunpack.c.l.b16 %v2488
        %v2562 = vunpack.c.l.b16 %v2489
        %v2563 = vpack.c.b16 %v2532, %v2531
        %v2564 = vpack.c.b16 %v2534, %v2533
        %v2565 = vpack.c.b16 %v2536, %v2535
        %v2566 = vpack.c.b16 %v2538, %v2537
        %v2567 = vpack.c.b16 %v2540, %v2539
        %v2568 = vpack.c.b16 %v2542, %v2541
        %v2569 = vpack.c.b16 %v2544, %v2543
        %v2570 = vpack.c.b16 %v2546, %v2545
        %v2571 = vpack.c.b16 %v2548, %v2547
        %v2572 = vpack.c.b16 %v2550, %v2549
        %v2573 = vpack.c.b16 %v2552, %v2551
        %v2574 = vpack.c.b16 %v2554, %v2553
        %v2575 = vpack.c.b16 %v2556, %v2555
        %v2576 = vpack.c.b16 %v2558, %v2557
        %v2577 = vpack.c.b16 %v2560, %v2559
        %v2578 = vpack.c.b16 %v2562, %v2561
        %v2587 = vunpack.c.l.b16 %v2491
        %v2588 = vunpack.c.l.b16 %v2492
        %v2589 = vunpack.c.l.b16 %v2493
        %v2590 = vunpack.c.l.b16 %v2494
        %v2591 = vunpack.c.l.b16 %v2495
        %v2592 = vunpack.c.l.b16 %v2496
        %v2593 = vunpack.c.l.b16 %v2497
        %v2594 = vunpack.c.l.b16 %v2498
        %v2595 = vpack.c.b16 %v2588, %v2587
        %v2596 = vpack.c.b16 %v2590, %v2589
        %v2597 = vpack.c.b16 %v2592, %v2591
        %v2598 = vpack.c.b16 %v2594, %v2593
        %v2604 = vsel %vm692, %v2563, 0
        %v2607 = vsel %vm692, %v2564, 0
        %v2610 = vsel %vm692, %v2565, 0
        %v2613 = vsel %vm692, %v2566, 0
        %v2616 = vsel %vm692, %v2567, 0
        %v2619 = vsel %vm692, %v2568, 0
        %v2622 = vsel %vm692, %v2569, 0
        %v2625 = vsel %vm692, %v2570, 0
        %v2628 = vsel %vm692, %v2571, 0
        %v2631 = vsel %vm692, %v2572, 0
        %v2634 = vsel %vm692, %v2573, 0
        %v2637 = vsel %vm692, %v2574, 0
        %v2640 = vsel %vm692, %v2575, 0
        %v2643 = vsel %vm692, %v2576, 0
        %v2646 = vsel %vm692, %v2577, 0
        %v2649 = vsel %vm692, %v2578, 0
        %2651 = vmatprep.subr.bf16.mxu0 0
        %2652 = vmatpush1.bf16.msra.mxu0 %v2595
        %2653 = vmatprep.subr.bf16.mxu0 0
        %2654 = vmatpush1.bf16.msra.mxu0 %v2596
        %2655 = vmatprep.subr.bf16.mxu0 0
        %2656 = vmatpush1.bf16.msra.mxu0 %v2597
        %2657 = vmatprep.subr.bf16.mxu0 0
        %2658 = vmatpush1.bf16.msra.mxu0 %v2598
        %2659 = vmatprep.subr.bf16.mxu0 0
        %2660 = vmatpush1.bf16.msra.mxu0 0
        %2661 = vmatprep.subr.bf16.mxu0 0
        %2662 = vmatpush1.bf16.msra.mxu0 0
        %2663 = vmatprep.subr.bf16.mxu0 0
        %2664 = vmatpush1.bf16.msra.mxu0 0
        %2665 = vmatprep.subr.bf16.mxu0 0
        %2666 = vmatpush1.bf16.msra.mxu0 0
        %2667 = vmatprep.subr.bf16.mxu0 0
        %2668 = vmatpush1.bf16.msra.mxu0 0
        %2669 = vmatprep.subr.bf16.mxu0 0
        %2670 = vmatpush1.bf16.msra.mxu0 0
        %2671 = vmatprep.subr.bf16.mxu0 0
        %2672 = vmatpush1.bf16.msra.mxu0 0
        %2673 = vmatprep.subr.bf16.mxu0 0
        %2674 = vmatpush1.bf16.msra.mxu0 0
        %2675 = vmatprep.subr.bf16.mxu0 0
        %2676 = vmatpush1.bf16.msra.mxu0 0
        %2677 = vmatprep.subr.bf16.mxu0 0
        %2678 = vmatpush1.bf16.msra.mxu0 0
        %2679 = vmatprep.subr.bf16.mxu0 0
        %2680 = vmatpush1.bf16.msra.mxu0 0
        %2681 = vmatprep.subr.bf16.mxu0 0
        %2682 = vmatpush1.bf16.msra.mxu0 0
        %2683 = vmatprep.mubr.bf16.mxu0 0
        %2684 = vmatmul.mubr.bf16.gmra.mrb[0].mxu0 %v2604
        %v2685 = vpop.f32.mrb[0].mxu0
        %v2686 = vadd.f32 0.0, %v2685
        %v2687 = vpop.f32.mrb[0].mxu0
        %v2688 = vpop.f32.mrb[0].mxu0
        %v2689 = vadd.f32 0.0, %v2688
        %v2690 = vpop.f32.mrb[0].mxu0
        %2691 = vmatprep.mubr.bf16.mxu0 0
        %2692 = vmatmul.mubr.bf16.gmra.mrb[0].mxu0 %v2607
        %v2693 = vpop.f32.mrb[0].mxu0
        %v2694 = vadd.f32 0.0, %v2693
        %v2695 = vpop.f32.mrb[0].mxu0
        %v2696 = vpop.f32.mrb[0].mxu0
        %v2697 = vadd.f32 0.0, %v2696
        %v2698 = vpop.f32.mrb[0].mxu0
        %2699 = vmatprep.mubr.bf16.mxu0 0
        %2700 = vmatmul.mubr.bf16.gmra.mrb[0].mxu0 %v2610
        %v2701 = vpop.f32.mrb[0].mxu0
        %v2702 = vadd.f32 0.0, %v2701
        %v2703 = vpop.f32.mrb[0].mxu0
        %v2704 = vpop.f32.mrb[0].mxu0
        %v2705 = vadd.f32 0.0, %v2704
        %v2706 = vpop.f32.mrb[0].mxu0
        %2707 = vmatprep.mubr.bf16.mxu0 0
        %2708 = vmatmul.mubr.bf16.gmra.mrb[0].mxu0 %v2613
        %v2709 = vpop.f32.mrb[0].mxu0
        %v2710 = vadd.f32 0.0, %v2709
        %v2711 = vpop.f32.mrb[0].mxu0
        %v2712 = vpop.f32.mrb[0].mxu0
        %v2713 = vadd.f32 0.0, %v2712
        %v2714 = vpop.f32.mrb[0].mxu0
        %2715 = vmatprep.mubr.bf16.mxu0 0
        %2716 = vmatmul.mubr.bf16.gmra.mrb[0].mxu0 %v2616
        %v2717 = vpop.f32.mrb[0].mxu0
        %v2718 = vadd.f32 0.0, %v2717
        %v2719 = vpop.f32.mrb[0].mxu0
        %v2720 = vpop.f32.mrb[0].mxu0
        %v2721 = vadd.f32 0.0, %v2720
        %v2722 = vpop.f32.mrb[0].mxu0
        %2723 = vmatprep.mubr.bf16.mxu0 0
        %2724 = vmatmul.mubr.bf16.gmra.mrb[0].mxu0 %v2619
        %v2725 = vpop.f32.mrb[0].mxu0
        %v2726 = vadd.f32 0.0, %v2725
        %v2727 = vpop.f32.mrb[0].mxu0
        %v2728 = vpop.f32.mrb[0].mxu0
        %v2729 = vadd.f32 0.0, %v2728
        %v2730 = vpop.f32.mrb[0].mxu0
        %2731 = vmatprep.mubr.bf16.mxu0 0
        %2732 = vmatmul.mubr.bf16.gmra.mrb[0].mxu0 %v2622
        %v2733 = vpop.f32.mrb[0].mxu0
        %v2734 = vadd.f32 0.0, %v2733
        %v2735 = vpop.f32.mrb[0].mxu0
        %v2736 = vpop.f32.mrb[0].mxu0
        %v2737 = vadd.f32 0.0, %v2736
        %v2738 = vpop.f32.mrb[0].mxu0
        %2739 = vmatprep.mubr.bf16.mxu0 0
        %2740 = vmatmul.mubr.bf16.gmra.mrb[0].mxu0 %v2625
        %v2741 = vpop.f32.mrb[0].mxu0
        %v2742 = vadd.f32 0.0, %v2741
        %v2743 = vpop.f32.mrb[0].mxu0
        %v2744 = vpop.f32.mrb[0].mxu0
        %v2745 = vadd.f32 0.0, %v2744
        %v2746 = vpop.f32.mrb[0].mxu0
        %2747 = vmatprep.mubr.bf16.mxu0 0
        %2748 = vmatmul.mubr.bf16.gmra.mrb[0].mxu0 %v2628
        %v2749 = vpop.f32.mrb[0].mxu0
        %v2750 = vadd.f32 0.0, %v2749
        %v2751 = vpop.f32.mrb[0].mxu0
        %v2752 = vpop.f32.mrb[0].mxu0
        %v2753 = vadd.f32 0.0, %v2752
        %v2754 = vpop.f32.mrb[0].mxu0
        %2755 = vmatprep.mubr.bf16.mxu0 0
        %2756 = vmatmul.mubr.bf16.gmra.mrb[0].mxu0 %v2631
        %v2757 = vpop.f32.mrb[0].mxu0
        %v2758 = vadd.f32 0.0, %v2757
        %v2759 = vpop.f32.mrb[0].mxu0
        %v2760 = vpop.f32.mrb[0].mxu0
        %v2761 = vadd.f32 0.0, %v2760
        %v2762 = vpop.f32.mrb[0].mxu0
        %2763 = vmatprep.mubr.bf16.mxu0 0
        %2764 = vmatmul.mubr.bf16.gmra.mrb[0].mxu0 %v2634
        %v2765 = vpop.f32.mrb[0].mxu0
        %v2766 = vadd.f32 0.0, %v2765
        %v2767 = vpop.f32.mrb[0].mxu0
        %v2768 = vpop.f32.mrb[0].mxu0
        %v2769 = vadd.f32 0.0, %v2768
        %v2770 = vpop.f32.mrb[0].mxu0
        %2771 = vmatprep.mubr.bf16.mxu0 0
        %2772 = vmatmul.mubr.bf16.gmra.mrb[0].mxu0 %v2637
        %v2773 = vpop.f32.mrb[0].mxu0
        %v2774 = vadd.f32 0.0, %v2773
        %v2775 = vpop.f32.mrb[0].mxu0
        %v2776 = vpop.f32.mrb[0].mxu0
        %v2777 = vadd.f32 0.0, %v2776
        %v2778 = vpop.f32.mrb[0].mxu0
        %2779 = vmatprep.mubr.bf16.mxu0 0
        %2780 = vmatmul.mubr.bf16.gmra.mrb[0].mxu0 %v2640
        %v2781 = vpop.f32.mrb[0].mxu0
        %v2782 = vadd.f32 0.0, %v2781
        %v2783 = vpop.f32.mrb[0].mxu0
        %v2784 = vpop.f32.mrb[0].mxu0
        %v2785 = vadd.f32 0.0, %v2784
        %v2786 = vpop.f32.mrb[0].mxu0
        %2787 = vmatprep.mubr.bf16.mxu0 0
        %2788 = vmatmul.mubr.bf16.gmra.mrb[0].mxu0 %v2643
        %v2789 = vpop.f32.mrb[0].mxu0
        %v2790 = vadd.f32 0.0, %v2789
        %v2791 = vpop.f32.mrb[0].mxu0
        %v2792 = vpop.f32.mrb[0].mxu0
        %v2793 = vadd.f32 0.0, %v2792
        %v2794 = vpop.f32.mrb[0].mxu0
        %2795 = vmatprep.mubr.bf16.mxu0 0
        %2796 = vmatmul.mubr.bf16.gmra.mrb[0].mxu0 %v2646
        %v2797 = vpop.f32.mrb[0].mxu0
        %v2798 = vadd.f32 0.0, %v2797
        %v2799 = vpop.f32.mrb[0].mxu0
        %v2800 = vpop.f32.mrb[0].mxu0
        %v2801 = vadd.f32 0.0, %v2800
        %v2802 = vpop.f32.mrb[0].mxu0
        %2803 = vmatprep.mubr.bf16.mxu0 0
        %2804 = vmatmul.mubr.bf16.gmra.mrb[0].mxu0 %v2649
        %v2805 = vpop.f32.mrb[0].mxu0
        %v2806 = vadd.f32 0.0, %v2805
        %v2807 = vpop.f32.mrb[0].mxu0
        %v2808 = vpop.f32.mrb[0].mxu0
        %v2809 = vadd.f32 0.0, %v2808
        %v2810 = vpop.f32.mrb[0].mxu0
        %2811 = vdwg.mxu0
        %v2812 = vadd.f32 %v2362, %v2686
        %v2813 = vadd.f32 %v2363, %v2689
        %v2814 = vadd.f32 %v2364, %v2694
        %v2815 = vadd.f32 %v2365, %v2697
        %v2816 = vadd.f32 %v2366, %v2702
        %v2817 = vadd.f32 %v2367, %v2705
        %v2818 = vadd.f32 %v2368, %v2710
        %v2819 = vadd.f32 %v2369, %v2713
        %v2820 = vadd.f32 %v2370, %v2718
        %v2821 = vadd.f32 %v2371, %v2721
        %v2822 = vadd.f32 %v2372, %v2726
        %v2823 = vadd.f32 %v2373, %v2729
        %v2824 = vadd.f32 %v2374, %v2734
        %v2825 = vadd.f32 %v2375, %v2737
        %v2826 = vadd.f32 %v2376, %v2742
        %v2827 = vadd.f32 %v2377, %v2745
        %v2828 = vadd.f32 %v2378, %v2750
        %v2829 = vadd.f32 %v2379, %v2753
        %v2830 = vadd.f32 %v2380, %v2758
        %v2831 = vadd.f32 %v2381, %v2761
        %v2832 = vadd.f32 %v2382, %v2766
        %v2833 = vadd.f32 %v2383, %v2769
        %v2834 = vadd.f32 %v2384, %v2774
        %v2835 = vadd.f32 %v2385, %v2777
        %v2836 = vadd.f32 %v2386, %v2782
        %v2837 = vadd.f32 %v2387, %v2785
        %v2838 = vadd.f32 %v2388, %v2790
        %v2839 = vadd.f32 %v2389, %v2793
        %v2840 = vadd.f32 %v2390, %v2798
        %v2841 = vadd.f32 %v2391, %v2801
        %v2842 = vadd.f32 %v2392, %v2806
        %v2843 = vadd.f32 %v2393, %v2809
        %v2844 = vld [vmem:[#allocation7] sm:$0x1]
        %v2846 = vlaneseq
        %v2847 = vshrl.u32 %v2846, 7
        %v2848 = vsub.s32 0, %v2847
        %v2849 = vrot.slane %v2844, %v2848
        %v2851 = vadd.f32 %v2812, %v2849
        %v2852 = vadd.f32 %v2813, %v2849
        %v2853 = vadd.f32 %v2814, %v2849
        %v2854 = vadd.f32 %v2815, %v2849
        %v2855 = vadd.f32 %v2816, %v2849
        %v2856 = vadd.f32 %v2817, %v2849
        %v2857 = vadd.f32 %v2818, %v2849
        %v2858 = vadd.f32 %v2819, %v2849
        %v2859 = vadd.f32 %v2820, %v2849
        %v2860 = vadd.f32 %v2821, %v2849
        %v2861 = vadd.f32 %v2822, %v2849
        %v2862 = vadd.f32 %v2823, %v2849
        %v2863 = vadd.f32 %v2824, %v2849
        %v2864 = vadd.f32 %v2825, %v2849
        %v2865 = vadd.f32 %v2826, %v2849
        %v2866 = vadd.f32 %v2827, %v2849
        %v2867 = vadd.f32 %v2828, %v2849
        %v2868 = vadd.f32 %v2829, %v2849
        %v2869 = vadd.f32 %v2830, %v2849
        %v2870 = vadd.f32 %v2831, %v2849
        %v2871 = vadd.f32 %v2832, %v2849
        %v2872 = vadd.f32 %v2833, %v2849
        %v2873 = vadd.f32 %v2834, %v2849
        %v2874 = vadd.f32 %v2835, %v2849
        %v2875 = vadd.f32 %v2836, %v2849
        %v2876 = vadd.f32 %v2837, %v2849
        %v2877 = vadd.f32 %v2838, %v2849
        %v2878 = vadd.f32 %v2839, %v2849
        %v2879 = vadd.f32 %v2840, %v2849
        %v2880 = vadd.f32 %v2841, %v2849
        %v2881 = vadd.f32 %v2842, %v2849
        %v2882 = vadd.f32 %v2843, %v2849
        %2883 = vst.msk [vmem:[%s235] sm:$0xff] %vm692, %v2851
        %2884 = vst.msk [vmem:[%s235 + $0x8] sm:$0xff] %vm692, %v2852
        %2885 = vst.msk [vmem:[%s235 + $0x10] sm:$0xff] %vm692, %v2853
        %2886 = vst.msk [vmem:[%s235 + $0x18] sm:$0xff] %vm692, %v2854
        %2887 = vst.msk [vmem:[%s235 + $0x20] sm:$0xff] %vm692, %v2855
        %2888 = vst.msk [vmem:[%s235 + $0x28] sm:$0xff] %vm692, %v2856
        %2889 = vst.msk [vmem:[%s235 + $0x30] sm:$0xff] %vm692, %v2857
        %2890 = vst.msk [vmem:[%s235 + $0x38] sm:$0xff] %vm692, %v2858
        %2891 = vst.msk [vmem:[%s235 + $0x40] sm:$0xff] %vm692, %v2859
        %2892 = vst.msk [vmem:[%s235 + $0x48] sm:$0xff] %vm692, %v2860
        %2893 = vst.msk [vmem:[%s235 + $0x50] sm:$0xff] %vm692, %v2861
        %2894 = vst.msk [vmem:[%s235 + $0x58] sm:$0xff] %vm692, %v2862
        %2895 = vst.msk [vmem:[%s235 + $0x60] sm:$0xff] %vm692, %v2863
        %2896 = vst.msk [vmem:[%s235 + $0x68] sm:$0xff] %vm692, %v2864
        %2897 = vst.msk [vmem:[%s235 + $0x70] sm:$0xff] %vm692, %v2865
        %2898 = vst.msk [vmem:[%s235 + $0x78] sm:$0xff] %vm692, %v2866
        %2899 = vst.msk [vmem:[%s235 + $0x80] sm:$0xff] %vm692, %v2867
        %2900 = vst.msk [vmem:[%s235 + $0x88] sm:$0xff] %vm692, %v2868
        %2901 = vst.msk [vmem:[%s235 + $0x90] sm:$0xff] %vm692, %v2869
        %2902 = vst.msk [vmem:[%s235 + $0x98] sm:$0xff] %vm692, %v2870
        %2903 = vst.msk [vmem:[%s235 + $0xa0] sm:$0xff] %vm692, %v2871
        %2904 = vst.msk [vmem:[%s235 + $0xa8] sm:$0xff] %vm692, %v2872
        %2905 = vst.msk [vmem:[%s235 + $0xb0] sm:$0xff] %vm692, %v2873
        %2906 = vst.msk [vmem:[%s235 + $0xb8] sm:$0xff] %vm692, %v2874
        %2907 = vst.msk [vmem:[%s235 + $0xc0] sm:$0xff] %vm692, %v2875
        %2908 = vst.msk [vmem:[%s235 + $0xc8] sm:$0xff] %vm692, %v2876
        %2909 = vst.msk [vmem:[%s235 + $0xd0] sm:$0xff] %vm692, %v2877
        %2910 = vst.msk [vmem:[%s235 + $0xd8] sm:$0xff] %vm692, %v2878
        %2911 = vst.msk [vmem:[%s235 + $0xe0] sm:$0xff] %vm692, %v2879
        %2912 = vst.msk [vmem:[%s235 + $0xe8] sm:$0xff] %vm692, %v2880
        %2913 = vst.msk [vmem:[%s235 + $0xf0] sm:$0xff] %vm692, %v2881
        %2914 = vst.msk [vmem:[%s235 + $0xf8] sm:$0xff] %vm692, %v2882
        %s2915 = sand.u32 %s113, 1
        %s2916 = scalar_lea.sflag [#allocation4], %s2915
        %s2917 = sand.u32 %s113, 1
        %s2918 = smul.addr %s2917, 256
        %s2919 = scalar_lea.vmem [#allocation8], %s2918
        // Predicated region
        $region45: #{tpu_custom_call.1} parent=31 // pred_check
          %p2920 = pneg %p123
        $region46: #{tpu_custom_call.1} parent=31 // pred_check_branch
          %2922 = sbr.rel (%p2920) target = $region48
        $region47: #{tpu_custom_call.1} parent=31 // pred_region
          %s2923 = smul.u32 4, %s25
          %s2924 = smul.u32 8, %s26
          %s2926 = ssub.s32 4096, 4096
          %2927 = vsyncadd %s2916, %s2926
          %s2928 = smul.addr %s2923, 8
          %s2929 = sadd.s32 %s2924, %s2928
          %s2930 = smul.addr %s2929, 128
          %s2931 = scalar_lea.hbm %s3, %s2930
          %s2932 = sshll.u32 %s2919, 4
          %s2933 = int_to_ptr.vmem [resolvable:$true] %s2932
          %2938 = dma.vmem_to_hbm [thread:$0]  %s2933, 4096, %s2931, %s2916, 128, 128, 8
        $region48: #{tpu_custom_call.1} parent=31 // pred_fallthru
          _
      $region32: #{tpu_custom_call.1} parent=5 // pred_fallthru
        _
      %p2939 = scmp.le.s32.totalorder 2, %s16
      // Predicated region
      $region49: #{tpu_custom_call.1} parent=5 // pred_check
        %p2940 = pneg %p2939
      $region50: #{tpu_custom_call.1} parent=5 // pred_check_branch
        %2942 = sbr.rel (%p2940) target = $region52
      $region51: #{tpu_custom_call.1} parent=5 // pred_region
        %s2943 = ssub.s32 %s16, 2
        // Predicated region
        $region53: #{tpu_custom_call.1} parent=51 // pred_check
          %p2944 = pneg %p129
        $region54: #{tpu_custom_call.1} parent=51 // pred_check_branch
          %2946 = sbr.rel (%p2944) target = $region56
        $region55: #{tpu_custom_call.1} parent=51 // pred_region
          %s2947 = sand.u32 %s114, 1
          %s2948 = scalar_lea.sflag [#allocation4], %s2947
          %s2949 = sand.u32 %s114, 1
          %s2950 = smul.addr %s2949, 256
          %s2951 = scalar_lea.vmem [#allocation8], %s2950
          %2952 = dma.done %s2948, 4096
        $region56: #{tpu_custom_call.1} parent=51 // pred_fallthru
          _
      $region52: #{tpu_custom_call.1} parent=5 // pred_fallthru
        _
    $region6: #{tpu_custom_call.1} parent=1 // loop_footer
      %s20 = sadd.s32 1, %s16
    $region7: #{tpu_custom_call.1} parent=1 // loop_footer_branch
      %15 = sbr.rel target = $region3
    $region8: #{tpu_custom_call.1} parent=1 // loop_exit
      _
    %2953 = vsyncpa [#allocation3], 1
    %s2954 = scalar_lea.sflag [#allocation3], 1
    %2955 = vsyncpa %s2954, 1
    %2956 = vsyncpa [#allocation6], 1
    %2957 = vsyncpa [#allocation4], 1
    %s2958 = scalar_lea.sflag [#allocation4], 1
    %2959 = vsyncpa %s2958, 1

</llo_original>
